<compile_context>
chip_gen: v7x
topology: tpu7x:2x2x1
jax: 0.10.0
libtpu: 0.0.40
codegen_flags: <defaults>
</compile_context>

<pallas_src>
import functools

import jax
import jax.numpy as jnp
from jax import lax
from jax.experimental import pallas as pl
from jax.experimental.pallas import tpu as pltpu

KSIZE = 7
PAD = 3  # kernel_size=7, padding=3 -> "same" spatial conv


def _vmem_capacity_bytes():
    """Physical VMEM of the local TPU (128 MiB on v5e/v6e, 64 MiB per
    TensorCore on v7x); conservative 64 MiB fallback if the query fails."""
    try:
        info = pltpu.get_tpu_info()
        cap = int(getattr(info, "vmem_capacity_bytes", 0))
        if cap > 0:
            return cap
    except Exception:
        pass
    return 64 * 1024 * 1024


def _pick_lane_group(B, HW, target_lanes=512, max_lanes=16384):
    """How many images to pack into the lane axis (deep ResNet stages have
    HW=49/196, far below one vreg's 128 lanes)."""
    if HW >= target_lanes:
        return 1
    g = 1
    for cand in range(1, B + 1):
        if B % cand:
            continue
        if cand * HW > max_lanes:
            break
        g = cand
        if cand * HW >= target_lanes:
            break
    return g


def _pick_group_block(num_groups, bytes_per_group, vmem_cap):
    """Groups per grid step: as large as the VMEM budget allows (in + out,
    double-buffered).  Only on the 64 MiB dual-TensorCore parts (v7x) do we
    keep >= 2 parallel grid steps so both cores get work; the 128 MiB
    single-TC parts (v5e/v6e) just take the biggest block that fits."""
    budget = vmem_cap * 7 // 10
    gb = max(1, min(num_groups, budget // max(1, 4 * bytes_per_group)))
    if vmem_cap <= 64 * 1024 * 1024:
        while gb > 1 and num_groups // gb < 2:
            gb -= 1
    while num_groups % gb != 0:
        gb -= 1
    return gb


def _channel_chunk(C, Gb, L, chunk_bytes=2 * 1024 * 1024):
    """Channel chunk for the reduction / multiply loops: a divisor of C,
    sublane-aligned (multiple of 8) when possible, sized so one f32 chunk
    stays around `chunk_bytes`."""
    cap = max(8, chunk_bytes // max(1, Gb * L * 4))
    cap = min(cap, 128, C)
    if C <= cap:
        return C
    best = 1
    for cc in range(1, cap + 1):
        if C % cc == 0 and (C % 8 != 0 or cc % 8 == 0):
            best = cc
    return best if best > 1 else C


def _spatial_attention_kernel(x_ref, rc_ref, w_ref, o_ref, maps_ref,
                              *, H, W, cc, p0, bf16_mul):
    # x_ref   : (Gb, C, L)    VMEM block; L = lane_group * H * W (lane dense)
    # rc_ref  : (2, L) i32    VMEM; rc[0] = per-lane image row, rc[1] = col
    # w_ref   : (98,)  f32    SMEM; flattened conv weight, layout [c, kh, kw]
    # o_ref   : (Gb, C, L)    VMEM output block
    # maps_ref: (2, Gb, Lpad) f32 scratch; lane-padded flat [avg, max] maps
    Gb, C, L = x_ref.shape
    Lpad = maps_ref.shape[-1]
    n_chunks = C // cc
    inv_c = 1.0 / C

    # ---- channel mean / max over C (chunked, vectorized over the block) ----
    if n_chunks == 1:
        xb = x_ref[...].astype(jnp.float32)                   # (Gb, C, L)
        ssum = jnp.sum(xb, axis=1)                            # (Gb, L)
        smax = jnp.max(xb, axis=1)
    else:
        # Static, sublane-aligned slices; short unrolled loop.
        # TODO(synk): for C>=256 the sum could go to the (idle) MXU as
        # ones(1,C) @ x; kept on the VPU/XLU here for simplicity.
        ssum = jnp.zeros((Gb, L), jnp.float32)
        smax = jnp.full((Gb, L), -jnp.inf, jnp.float32)
        for k in range(n_chunks):
            chunk = x_ref[:, k * cc:(k + 1) * cc, :].astype(jnp.float32)
            ssum = ssum + jnp.sum(chunk, axis=1)
            smax = jnp.maximum(smax, jnp.max(chunk, axis=1))

    # ---- stage [avg, max] into the lane-padded scratch (aligned stores) ----
    # The lane pads are never used as valid data (masks below); clearing them
    # just keeps mask*garbage finite.
    zpad = jnp.zeros((2, Gb, p0), jnp.float32)
    maps_ref[:, :, 0:p0] = zpad
    maps_ref[:, :, p0 + L:Lpad] = zpad
    maps_ref[0, :, p0:p0 + L] = ssum * inv_c                  # channel avg
    maps_ref[1, :, p0:p0 + L] = smax                          # channel max

    # ---- per-lane boundary masks (hoisted; shared by all taps / groups) ----
    row = rc_ref[0:1, :]                                      # (1, L) i32
    col = rc_ref[1:2, :]                                      # (1, L) i32
    rmask = [jnp.where((row + (i - PAD) >= 0) & (row + (i - PAD) < H), 1.0, 0.0)
             for i in range(KSIZE)]
    cmask = [jnp.where((col + (j - PAD) >= 0) & (col + (j - PAD) < W), 1.0, 0.0)
             for j in range(KSIZE)]

    # ---- 7x7 "same" conv, 2 in-channels -> 1 out-channel (VPU) ----
    # Tap (i, j) = static lane-shifted window read of the flat maps + FMA; the
    # masks supply the zero padding and per-image isolation (lane packing), so
    # circular / cross-image values are multiplied by 0.  Single output
    # channel -> MXU would be <1% utilized, so this stays on the VPU.
    acc = jnp.zeros((Gb, L), jnp.float32)
    for i in range(KSIZE):
        for j in range(KSIZE):
            off = p0 + (i - PAD) * W + (j - PAD)
            w_avg = w_ref[i * KSIZE + j]                      # SMEM scalars
            w_max = w_ref[KSIZE * KSIZE + i * KSIZE + j]
            tap = (maps_ref[0, :, off:off + L] * w_avg
                   + maps_ref[1, :, off:off + L] * w_max)
            acc = acc + tap * (rmask[i] * cmask[j])
    attn = jax.nn.sigmoid(acc)                                # (Gb, L) f32, EUP

    # ---- out = sigmoid(conv([avg, max])) * x, broadcast over channels ----
    use_bf16 = bf16_mul and jnp.dtype(o_ref.dtype) == jnp.dtype(jnp.bfloat16)
    mdt = o_ref.dtype if use_bf16 else jnp.float32
    attn_b = attn.astype(mdt)[:, None, :]                     # (Gb, 1, L)
    if n_chunks == 1:
        o_ref[...] = (x_ref[...].astype(mdt) * attn_b).astype(o_ref.dtype)
    else:
        for k in range(n_chunks):
            xc = x_ref[:, k * cc:(k + 1) * cc, :].astype(mdt)
            o_ref[:, k * cc:(k + 1) * cc, :] = (xc * attn_b).astype(o_ref.dtype)


def spatial_attention(x, w, *, lane_group=None, block_groups=None,
                      bf16_multiply=True):
    """x: (B, C, H, W) float32/bfloat16; w: (1, 2, 7, 7) conv weight (OIHW).

    bf16_multiply: do the final broadcast-multiply in bf16 when x is bf16
    (good on v6e/v7x; set False on v5e, which has no bf16 VALU).
    """
    B, C, H, W = x.shape
    HW = H * W
    io_dtype = x.dtype
    itemsize = jnp.dtype(io_dtype).itemsize

    g = lane_group if lane_group is not None else _pick_lane_group(B, HW)
    assert B % g == 0, "lane_group must divide the batch"
    NG = B // g
    L = g * HW

    # Lane pad so every (di, dj) tap window stays inside the scratch; p0 is a
    # multiple of 128 so the interior store is lane-aligned.
    p0 = -(-(PAD * W + PAD) // 128) * 128
    Lpad = L + 2 * p0

    if g == 1:
        x2 = x.reshape(NG, C, L)
    else:
        # Layout plumbing only: pack g images into the lane axis so the deep
        # (7x7 / 14x14) stages still run with >=128-wide lanes.
        x2 = x.reshape(NG, g, C, HW).transpose(0, 2, 1, 3).reshape(NG, C, L)

    # Per-lane (row, col) inside its image — drives the conv boundary masks.
    pos = jnp.arange(L, dtype=jnp.int32) % HW
    rc = jnp.stack([pos // W, pos % W], axis=0).astype(jnp.int32)   # (2, L)

    w_flat = w.reshape(-1).astype(jnp.float32)                      # (98,)

    vmem_cap = _vmem_capacity_bytes()
    bytes_per_group = C * L * itemsize
    Gb = block_groups if block_groups is not None else _pick_group_block(
        NG, bytes_per_group, vmem_cap)
    assert NG % Gb == 0, "block_groups must divide B // lane_group"
    cc = _channel_chunk(C, Gb, L)

    block_bytes = Gb * bytes_per_group
    scratch_bytes = 2 * Gb * Lpad * 4
    need = 4 * block_bytes + scratch_bytes + (4 << 20)
    # Never request the full physical VMEM (Mosaic needs internal scratch);
    # 7/8 of capacity = 56 MiB on v7x, 112 MiB on v5e/v6e.
    vmem_limit = int(min(vmem_cap * 7 // 8, max(32 * 1024 * 1024, need)))

    kernel = functools.partial(_spatial_attention_kernel, H=H, W=W, cc=cc,
                               p0=p0, bf16_mul=bf16_multiply)

    out2 = pl.pallas_call(
        kernel,
        out_shape=jax.ShapeDtypeStruct((NG, C, L), io_dtype),
        grid_spec=pltpu.PrefetchScalarGridSpec(
            num_scalar_prefetch=0,
            grid=(NG // Gb,),
            in_specs=[
                pl.BlockSpec((Gb, C, L), lambda i: (i, 0, 0)),
                pl.BlockSpec((2, L), lambda i: (0, 0)),
                pl.BlockSpec(memory_space=pltpu.MemorySpace.SMEM),
            ],
            out_specs=pl.BlockSpec((Gb, C, L), lambda i: (i, 0, 0)),
            scratch_shapes=[pltpu.VMEM((2, Gb, Lpad), jnp.float32)],
        ),
        compiler_params=pltpu.CompilerParams(
            dimension_semantics=("parallel",),
            vmem_limit_bytes=vmem_limit,
        ),
    )(x2, rc, w_flat)

    if g == 1:
        return out2.reshape(B, C, H, W)
    return out2.reshape(NG, C, g, HW).transpose(0, 2, 1, 3).reshape(B, C, H, W)


def spatial_attention_ref(x, w):
    """Plain-JAX reference matching the PyTorch SpatialAttention.forward."""
    avg_out = jnp.mean(x, axis=1, keepdims=True)
    max_out = jnp.max(x, axis=1, keepdims=True)
    out = jnp.concatenate([avg_out, max_out], axis=1)
    out = lax.conv_general_dilated(
        out, w, window_strides=(1, 1), padding=[(PAD, PAD), (PAD, PAD)],
        dimension_numbers=("NCHW", "OIHW", "NCHW"))
    return jax.nn.sigmoid(out) * x


if __name__ == "__main__":
    key = jax.random.PRNGKey(0)
    kx, kw = jax.random.split(key)

    # Conv2d(2, 1, 7, padding=3, bias=False) weight, OIHW.
    w = jax.random.normal(kw, (1, 2, KSIZE, KSIZE), dtype=jnp.float32) * 0.1

    # --- f32, 16x16 maps (packed-lane path: 2 images share the lane axis) ---
    B, C, H, Wd = 2, 4, 16, 16
    x = jax.random.normal(kx, (B, C, H, Wd), dtype=jnp.float32)
    out = jax.block_until_ready(spatial_attention(x, w))
    ref = spatial_attention_ref(x, w)
    assert out.shape == (B, C, H, Wd)
    assert jnp.allclose(out, ref, atol=2e-5, rtol=2e-5), "f32 mismatch vs reference"

    # --- bf16 activations (reduction/conv in f32, final multiply in bf16) ---
    x_bf16 = x.astype(jnp.bfloat16)
    out_bf16 = jax.block_until_ready(spatial_attention(x_bf16, w))
    assert out_bf16.shape == (B, C, H, Wd) and out_bf16.dtype == jnp.bfloat16
    ref_bf = spatial_attention_ref(x_bf16.astype(jnp.float32), w)
    assert jnp.allclose(out_bf16.astype(jnp.float32), ref_bf, atol=2e-2, rtol=2e-2), \
        "bf16 mismatch vs reference"

    # --- f32, 32x32 maps, unpacked lanes + a 2-step grid ---
    x2 = jax.random.normal(kx, (2, 4, 32, 32), dtype=jnp.float32)
    out2 = jax.block_until_ready(
        spatial_attention(x2, w, lane_group=1, block_groups=1))
    ref2 = spatial_attention_ref(x2, w)
    assert jnp.allclose(out2, ref2, atol=2e-5, rtol=2e-5), "f32 (32x32) mismatch"

    print("KERNEL_OK")
</pallas_src>

<mosaic_0001>
module attributes {stable_mosaic.version = 11 : i64} {
  func.func @_spatial_attention_kernel(%arg0: i32, %arg1: memref<1x4x512xf32, #tpu.memory_space<vmem>>, %arg2: memref<2x512xi32, #tpu.memory_space<vmem>>, %arg3: memref<98xf32, #tpu.memory_space<smem>>, %arg4: memref<1x4x512xf32, #tpu.memory_space<vmem>>, %arg5: memref<2x1x768xf32, #tpu.memory_space<vmem>>) attributes {dimension_semantics = [#tpu.dimension_semantics<parallel>], iteration_bounds = array<i64: 1>, scalar_prefetch = 0 : i64, scratch_operands = 1 : i64, tpu.core_type = #tpu.core_type<tc>, window_params = [{transform_indices = @transform_0, window_bounds = array<i64: 1, 4, 512>}, {pipeline_mode = #tpu.pipeline_mode<synchronous>, transform_indices = @transform_1, window_bounds = array<i64: 2, 512>}, {transform_indices = @transform_2, window_bounds = array<i64: 98>}, {transform_indices = @transform_3, window_bounds = array<i64: 1, 4, 512>}]} {
    %c0 = arith.constant 0 : index
    %c0_0 = arith.constant 0 : index
    %c0_1 = arith.constant 0 : index
    %0 = vector.load %arg1[%c0, %c0_0, %c0_1] : memref<1x4x512xf32, #tpu.memory_space<vmem>>, vector<1x4x512xf32>
    %cst = arith.constant dense<0.000000e+00> : vector<1x512xf32>
    %1 = vector.multi_reduction <add>, %0, %cst [1] : vector<1x4x512xf32> to vector<1x512xf32>
    %cst_2 = arith.constant dense<0xFF800000> : vector<1x512xf32>
    %2 = vector.multi_reduction <maximumf>, %0, %cst_2 [1] : vector<1x4x512xf32> to vector<1x512xf32>
    %cst_3 = arith.constant 0.000000e+00 : f32
    %3 = vector.broadcast %cst_3 : f32 to vector<2x1x128xf32>
    %c0_4 = arith.constant 0 : index
    %c0_5 = arith.constant 0 : index
    %c0_6 = arith.constant 0 : index
    %4 = vector.load %arg5[%c0_4, %c0_5, %c0_6] : memref<2x1x768xf32, #tpu.memory_space<vmem>>, vector<2x1x128xf32>
    tpu.vector_store %arg5[%c0_4, %c0_5, %c0_6], %3 {strides = array<i32>} : memref<2x1x768xf32, #tpu.memory_space<vmem>>, vector<2x1x128xf32>,
    %c0_7 = arith.constant 0 : index
    %c0_8 = arith.constant 0 : index
    %c640 = arith.constant 640 : index
    %5 = vector.load %arg5[%c0_7, %c0_8, %c640] : memref<2x1x768xf32, #tpu.memory_space<vmem>>, vector<2x1x128xf32>
    tpu.vector_store %arg5[%c0_7, %c0_8, %c640], %3 {strides = array<i32>} : memref<2x1x768xf32, #tpu.memory_space<vmem>>, vector<2x1x128xf32>,
    %cst_9 = arith.constant 2.500000e-01 : f32
    %6 = vector.broadcast %cst_9 : f32 to vector<1x512xf32>
    %7 = arith.mulf %1, %6 : vector<1x512xf32>
    %c0_10 = arith.constant 0 : index
    %c0_11 = arith.constant 0 : index
    %c128 = arith.constant 128 : index
    %8 = vector.load %arg5[%c0_10, %c0_11, %c128] : memref<2x1x768xf32, #tpu.memory_space<vmem>>, vector<1x1x512xf32>
    %9 = vector.shape_cast %8 : vector<1x1x512xf32> to vector<1x512xf32>
    %10 = vector.shape_cast %7 : vector<1x512xf32> to vector<1x1x512xf32>
    tpu.vector_store %arg5[%c0_10, %c0_11, %c128], %10 {strides = array<i32>} : memref<2x1x768xf32, #tpu.memory_space<vmem>>, vector<1x1x512xf32>,
    %c1 = arith.constant 1 : index
    %c0_12 = arith.constant 0 : index
    %c128_13 = arith.constant 128 : index
    %11 = vector.load %arg5[%c1, %c0_12, %c128_13] : memref<2x1x768xf32, #tpu.memory_space<vmem>>, vector<1x1x512xf32>
    %12 = vector.shape_cast %11 : vector<1x1x512xf32> to vector<1x512xf32>
    %13 = vector.shape_cast %2 : vector<1x512xf32> to vector<1x1x512xf32>
    tpu.vector_store %arg5[%c1, %c0_12, %c128_13], %13 {strides = array<i32>} : memref<2x1x768xf32, #tpu.memory_space<vmem>>, vector<1x1x512xf32>,
    %c0_14 = arith.constant 0 : index
    %c0_15 = arith.constant 0 : index
    %14 = vector.load %arg2[%c0_14, %c0_15] : memref<2x512xi32, #tpu.memory_space<vmem>>, vector<1x512xi32>
    %c1_16 = arith.constant 1 : index
    %c0_17 = arith.constant 0 : index
    %15 = vector.load %arg2[%c1_16, %c0_17] : memref<2x512xi32, #tpu.memory_space<vmem>>, vector<1x512xi32>
    %c-3_i32 = arith.constant -3 : i32
    %16 = vector.broadcast %c-3_i32 : i32 to vector<1x512xi32>
    %17 = arith.addi %14, %16 : vector<1x512xi32>
    %c0_i32 = arith.constant 0 : i32
    %18 = vector.broadcast %c0_i32 : i32 to vector<1x512xi32>
    %19 = arith.cmpi sge, %17, %18 : vector<1x512xi32>
    %c-3_i32_18 = arith.constant -3 : i32
    %20 = vector.broadcast %c-3_i32_18 : i32 to vector<1x512xi32>
    %21 = arith.addi %14, %20 : vector<1x512xi32>
    %c16_i32 = arith.constant 16 : i32
    %22 = vector.broadcast %c16_i32 : i32 to vector<1x512xi32>
    %23 = arith.cmpi slt, %21, %22 : vector<1x512xi32>
    %24 = arith.andi %19, %23 : vector<1x512xi1>
    %cst_19 = arith.constant 1.000000e+00 : f32
    %cst_20 = arith.constant 0.000000e+00 : f32
    %25 = vector.broadcast %cst_19 : f32 to vector<1x512xf32>
    %26 = vector.broadcast %cst_20 : f32 to vector<1x512xf32>
    %27 = arith.select %24, %25, %26 : vector<1x512xi1>, vector<1x512xf32>
    %c-2_i32 = arith.constant -2 : i32
    %28 = vector.broadcast %c-2_i32 : i32 to vector<1x512xi32>
    %29 = arith.addi %14, %28 : vector<1x512xi32>
    %c0_i32_21 = arith.constant 0 : i32
    %30 = vector.broadcast %c0_i32_21 : i32 to vector<1x512xi32>
    %31 = arith.cmpi sge, %29, %30 : vector<1x512xi32>
    %c-2_i32_22 = arith.constant -2 : i32
    %32 = vector.broadcast %c-2_i32_22 : i32 to vector<1x512xi32>
    %33 = arith.addi %14, %32 : vector<1x512xi32>
    %c16_i32_23 = arith.constant 16 : i32
    %34 = vector.broadcast %c16_i32_23 : i32 to vector<1x512xi32>
    %35 = arith.cmpi slt, %33, %34 : vector<1x512xi32>
    %36 = arith.andi %31, %35 : vector<1x512xi1>
    %cst_24 = arith.constant 1.000000e+00 : f32
    %cst_25 = arith.constant 0.000000e+00 : f32
    %37 = vector.broadcast %cst_24 : f32 to vector<1x512xf32>
    %38 = vector.broadcast %cst_25 : f32 to vector<1x512xf32>
    %39 = arith.select %36, %37, %38 : vector<1x512xi1>, vector<1x512xf32>
    %c-1_i32 = arith.constant -1 : i32
    %40 = vector.broadcast %c-1_i32 : i32 to vector<1x512xi32>
    %41 = arith.addi %14, %40 : vector<1x512xi32>
    %c0_i32_26 = arith.constant 0 : i32
    %42 = vector.broadcast %c0_i32_26 : i32 to vector<1x512xi32>
    %43 = arith.cmpi sge, %41, %42 : vector<1x512xi32>
    %c-1_i32_27 = arith.constant -1 : i32
    %44 = vector.broadcast %c-1_i32_27 : i32 to vector<1x512xi32>
    %45 = arith.addi %14, %44 : vector<1x512xi32>
    %c16_i32_28 = arith.constant 16 : i32
    %46 = vector.broadcast %c16_i32_28 : i32 to vector<1x512xi32>
    %47 = arith.cmpi slt, %45, %46 : vector<1x512xi32>
    %48 = arith.andi %43, %47 : vector<1x512xi1>
    %cst_29 = arith.constant 1.000000e+00 : f32
    %cst_30 = arith.constant 0.000000e+00 : f32
    %49 = vector.broadcast %cst_29 : f32 to vector<1x512xf32>
    %50 = vector.broadcast %cst_30 : f32 to vector<1x512xf32>
    %51 = arith.select %48, %49, %50 : vector<1x512xi1>, vector<1x512xf32>
    %c0_i32_31 = arith.constant 0 : i32
    %52 = vector.broadcast %c0_i32_31 : i32 to vector<1x512xi32>
    %53 = arith.addi %14, %52 : vector<1x512xi32>
    %c0_i32_32 = arith.constant 0 : i32
    %54 = vector.broadcast %c0_i32_32 : i32 to vector<1x512xi32>
    %55 = arith.cmpi sge, %53, %54 : vector<1x512xi32>
    %c0_i32_33 = arith.constant 0 : i32
    %56 = vector.broadcast %c0_i32_33 : i32 to vector<1x512xi32>
    %57 = arith.addi %14, %56 : vector<1x512xi32>
    %c16_i32_34 = arith.constant 16 : i32
    %58 = vector.broadcast %c16_i32_34 : i32 to vector<1x512xi32>
    %59 = arith.cmpi slt, %57, %58 : vector<1x512xi32>
    %60 = arith.andi %55, %59 : vector<1x512xi1>
    %cst_35 = arith.constant 1.000000e+00 : f32
    %cst_36 = arith.constant 0.000000e+00 : f32
    %61 = vector.broadcast %cst_35 : f32 to vector<1x512xf32>
    %62 = vector.broadcast %cst_36 : f32 to vector<1x512xf32>
    %63 = arith.select %60, %61, %62 : vector<1x512xi1>, vector<1x512xf32>
    %c1_i32 = arith.constant 1 : i32
    %64 = vector.broadcast %c1_i32 : i32 to vector<1x512xi32>
    %65 = arith.addi %14, %64 : vector<1x512xi32>
    %c0_i32_37 = arith.constant 0 : i32
    %66 = vector.broadcast %c0_i32_37 : i32 to vector<1x512xi32>
    %67 = arith.cmpi sge, %65, %66 : vector<1x512xi32>
    %c1_i32_38 = arith.constant 1 : i32
    %68 = vector.broadcast %c1_i32_38 : i32 to vector<1x512xi32>
    %69 = arith.addi %14, %68 : vector<1x512xi32>
    %c16_i32_39 = arith.constant 16 : i32
    %70 = vector.broadcast %c16_i32_39 : i32 to vector<1x512xi32>
    %71 = arith.cmpi slt, %69, %70 : vector<1x512xi32>
    %72 = arith.andi %67, %71 : vector<1x512xi1>
    %cst_40 = arith.constant 1.000000e+00 : f32
    %cst_41 = arith.constant 0.000000e+00 : f32
    %73 = vector.broadcast %cst_40 : f32 to vector<1x512xf32>
    %74 = vector.broadcast %cst_41 : f32 to vector<1x512xf32>
    %75 = arith.select %72, %73, %74 : vector<1x512xi1>, vector<1x512xf32>
    %c2_i32 = arith.constant 2 : i32
    %76 = vector.broadcast %c2_i32 : i32 to vector<1x512xi32>
    %77 = arith.addi %14, %76 : vector<1x512xi32>
    %c0_i32_42 = arith.constant 0 : i32
    %78 = vector.broadcast %c0_i32_42 : i32 to vector<1x512xi32>
    %79 = arith.cmpi sge, %77, %78 : vector<1x512xi32>
    %c2_i32_43 = arith.constant 2 : i32
    %80 = vector.broadcast %c2_i32_43 : i32 to vector<1x512xi32>
    %81 = arith.addi %14, %80 : vector<1x512xi32>
    %c16_i32_44 = arith.constant 16 : i32
    %82 = vector.broadcast %c16_i32_44 : i32 to vector<1x512xi32>
    %83 = arith.cmpi slt, %81, %82 : vector<1x512xi32>
    %84 = arith.andi %79, %83 : vector<1x512xi1>
    %cst_45 = arith.constant 1.000000e+00 : f32
    %cst_46 = arith.constant 0.000000e+00 : f32
    %85 = vector.broadcast %cst_45 : f32 to vector<1x512xf32>
    %86 = vector.broadcast %cst_46 : f32 to vector<1x512xf32>
    %87 = arith.select %84, %85, %86 : vector<1x512xi1>, vector<1x512xf32>
    %c3_i32 = arith.constant 3 : i32
    %88 = vector.broadcast %c3_i32 : i32 to vector<1x512xi32>
    %89 = arith.addi %14, %88 : vector<1x512xi32>
    %c0_i32_47 = arith.constant 0 : i32
    %90 = vector.broadcast %c0_i32_47 : i32 to vector<1x512xi32>
    %91 = arith.cmpi sge, %89, %90 : vector<1x512xi32>
    %c3_i32_48 = arith.constant 3 : i32
    %92 = vector.broadcast %c3_i32_48 : i32 to vector<1x512xi32>
    %93 = arith.addi %14, %92 : vector<1x512xi32>
    %c16_i32_49 = arith.constant 16 : i32
    %94 = vector.broadcast %c16_i32_49 : i32 to vector<1x512xi32>
    %95 = arith.cmpi slt, %93, %94 : vector<1x512xi32>
    %96 = arith.andi %91, %95 : vector<1x512xi1>
    %cst_50 = arith.constant 1.000000e+00 : f32
    %cst_51 = arith.constant 0.000000e+00 : f32
    %97 = vector.broadcast %cst_50 : f32 to vector<1x512xf32>
    %98 = vector.broadcast %cst_51 : f32 to vector<1x512xf32>
    %99 = arith.select %96, %97, %98 : vector<1x512xi1>, vector<1x512xf32>
    %c-3_i32_52 = arith.constant -3 : i32
    %100 = vector.broadcast %c-3_i32_52 : i32 to vector<1x512xi32>
    %101 = arith.addi %15, %100 : vector<1x512xi32>
    %c0_i32_53 = arith.constant 0 : i32
    %102 = vector.broadcast %c0_i32_53 : i32 to vector<1x512xi32>
    %103 = arith.cmpi sge, %101, %102 : vector<1x512xi32>
    %c-3_i32_54 = arith.constant -3 : i32
    %104 = vector.broadcast %c-3_i32_54 : i32 to vector<1x512xi32>
    %105 = arith.addi %15, %104 : vector<1x512xi32>
    %c16_i32_55 = arith.constant 16 : i32
    %106 = vector.broadcast %c16_i32_55 : i32 to vector<1x512xi32>
    %107 = arith.cmpi slt, %105, %106 : vector<1x512xi32>
    %108 = arith.andi %103, %107 : vector<1x512xi1>
    %cst_56 = arith.constant 1.000000e+00 : f32
    %cst_57 = arith.constant 0.000000e+00 : f32
    %109 = vector.broadcast %cst_56 : f32 to vector<1x512xf32>
    %110 = vector.broadcast %cst_57 : f32 to vector<1x512xf32>
    %111 = arith.select %108, %109, %110 : vector<1x512xi1>, vector<1x512xf32>
    %c-2_i32_58 = arith.constant -2 : i32
    %112 = vector.broadcast %c-2_i32_58 : i32 to vector<1x512xi32>
    %113 = arith.addi %15, %112 : vector<1x512xi32>
    %c0_i32_59 = arith.constant 0 : i32
    %114 = vector.broadcast %c0_i32_59 : i32 to vector<1x512xi32>
    %115 = arith.cmpi sge, %113, %114 : vector<1x512xi32>
    %c-2_i32_60 = arith.constant -2 : i32
    %116 = vector.broadcast %c-2_i32_60 : i32 to vector<1x512xi32>
    %117 = arith.addi %15, %116 : vector<1x512xi32>
    %c16_i32_61 = arith.constant 16 : i32
    %118 = vector.broadcast %c16_i32_61 : i32 to vector<1x512xi32>
    %119 = arith.cmpi slt, %117, %118 : vector<1x512xi32>
    %120 = arith.andi %115, %119 : vector<1x512xi1>
    %cst_62 = arith.constant 1.000000e+00 : f32
    %cst_63 = arith.constant 0.000000e+00 : f32
    %121 = vector.broadcast %cst_62 : f32 to vector<1x512xf32>
    %122 = vector.broadcast %cst_63 : f32 to vector<1x512xf32>
    %123 = arith.select %120, %121, %122 : vector<1x512xi1>, vector<1x512xf32>
    %c-1_i32_64 = arith.constant -1 : i32
    %124 = vector.broadcast %c-1_i32_64 : i32 to vector<1x512xi32>
    %125 = arith.addi %15, %124 : vector<1x512xi32>
    %c0_i32_65 = arith.constant 0 : i32
    %126 = vector.broadcast %c0_i32_65 : i32 to vector<1x512xi32>
    %127 = arith.cmpi sge, %125, %126 : vector<1x512xi32>
    %c-1_i32_66 = arith.constant -1 : i32
    %128 = vector.broadcast %c-1_i32_66 : i32 to vector<1x512xi32>
    %129 = arith.addi %15, %128 : vector<1x512xi32>
    %c16_i32_67 = arith.constant 16 : i32
    %130 = vector.broadcast %c16_i32_67 : i32 to vector<1x512xi32>
    %131 = arith.cmpi slt, %129, %130 : vector<1x512xi32>
    %132 = arith.andi %127, %131 : vector<1x512xi1>
    %cst_68 = arith.constant 1.000000e+00 : f32
    %cst_69 = arith.constant 0.000000e+00 : f32
    %133 = vector.broadcast %cst_68 : f32 to vector<1x512xf32>
    %134 = vector.broadcast %cst_69 : f32 to vector<1x512xf32>
    %135 = arith.select %132, %133, %134 : vector<1x512xi1>, vector<1x512xf32>
    %c0_i32_70 = arith.constant 0 : i32
    %136 = vector.broadcast %c0_i32_70 : i32 to vector<1x512xi32>
    %137 = arith.addi %15, %136 : vector<1x512xi32>
    %c0_i32_71 = arith.constant 0 : i32
    %138 = vector.broadcast %c0_i32_71 : i32 to vector<1x512xi32>
    %139 = arith.cmpi sge, %137, %138 : vector<1x512xi32>
    %c0_i32_72 = arith.constant 0 : i32
    %140 = vector.broadcast %c0_i32_72 : i32 to vector<1x512xi32>
    %141 = arith.addi %15, %140 : vector<1x512xi32>
    %c16_i32_73 = arith.constant 16 : i32
    %142 = vector.broadcast %c16_i32_73 : i32 to vector<1x512xi32>
    %143 = arith.cmpi slt, %141, %142 : vector<1x512xi32>
    %144 = arith.andi %139, %143 : vector<1x512xi1>
    %cst_74 = arith.constant 1.000000e+00 : f32
    %cst_75 = arith.constant 0.000000e+00 : f32
    %145 = vector.broadcast %cst_74 : f32 to vector<1x512xf32>
    %146 = vector.broadcast %cst_75 : f32 to vector<1x512xf32>
    %147 = arith.select %144, %145, %146 : vector<1x512xi1>, vector<1x512xf32>
    %c1_i32_76 = arith.constant 1 : i32
    %148 = vector.broadcast %c1_i32_76 : i32 to vector<1x512xi32>
    %149 = arith.addi %15, %148 : vector<1x512xi32>
    %c0_i32_77 = arith.constant 0 : i32
    %150 = vector.broadcast %c0_i32_77 : i32 to vector<1x512xi32>
    %151 = arith.cmpi sge, %149, %150 : vector<1x512xi32>
    %c1_i32_78 = arith.constant 1 : i32
    %152 = vector.broadcast %c1_i32_78 : i32 to vector<1x512xi32>
    %153 = arith.addi %15, %152 : vector<1x512xi32>
    %c16_i32_79 = arith.constant 16 : i32
    %154 = vector.broadcast %c16_i32_79 : i32 to vector<1x512xi32>
    %155 = arith.cmpi slt, %153, %154 : vector<1x512xi32>
    %156 = arith.andi %151, %155 : vector<1x512xi1>
    %cst_80 = arith.constant 1.000000e+00 : f32
    %cst_81 = arith.constant 0.000000e+00 : f32
    %157 = vector.broadcast %cst_80 : f32 to vector<1x512xf32>
    %158 = vector.broadcast %cst_81 : f32 to vector<1x512xf32>
    %159 = arith.select %156, %157, %158 : vector<1x512xi1>, vector<1x512xf32>
    %c2_i32_82 = arith.constant 2 : i32
    %160 = vector.broadcast %c2_i32_82 : i32 to vector<1x512xi32>
    %161 = arith.addi %15, %160 : vector<1x512xi32>
    %c0_i32_83 = arith.constant 0 : i32
    %162 = vector.broadcast %c0_i32_83 : i32 to vector<1x512xi32>
    %163 = arith.cmpi sge, %161, %162 : vector<1x512xi32>
    %c2_i32_84 = arith.constant 2 : i32
    %164 = vector.broadcast %c2_i32_84 : i32 to vector<1x512xi32>
    %165 = arith.addi %15, %164 : vector<1x512xi32>
    %c16_i32_85 = arith.constant 16 : i32
    %166 = vector.broadcast %c16_i32_85 : i32 to vector<1x512xi32>
    %167 = arith.cmpi slt, %165, %166 : vector<1x512xi32>
    %168 = arith.andi %163, %167 : vector<1x512xi1>
    %cst_86 = arith.constant 1.000000e+00 : f32
    %cst_87 = arith.constant 0.000000e+00 : f32
    %169 = vector.broadcast %cst_86 : f32 to vector<1x512xf32>
    %170 = vector.broadcast %cst_87 : f32 to vector<1x512xf32>
    %171 = arith.select %168, %169, %170 : vector<1x512xi1>, vector<1x512xf32>
    %c3_i32_88 = arith.constant 3 : i32
    %172 = vector.broadcast %c3_i32_88 : i32 to vector<1x512xi32>
    %173 = arith.addi %15, %172 : vector<1x512xi32>
    %c0_i32_89 = arith.constant 0 : i32
    %174 = vector.broadcast %c0_i32_89 : i32 to vector<1x512xi32>
    %175 = arith.cmpi sge, %173, %174 : vector<1x512xi32>
    %c3_i32_90 = arith.constant 3 : i32
    %176 = vector.broadcast %c3_i32_90 : i32 to vector<1x512xi32>
    %177 = arith.addi %15, %176 : vector<1x512xi32>
    %c16_i32_91 = arith.constant 16 : i32
    %178 = vector.broadcast %c16_i32_91 : i32 to vector<1x512xi32>
    %179 = arith.cmpi slt, %177, %178 : vector<1x512xi32>
    %180 = arith.andi %175, %179 : vector<1x512xi1>
    %cst_92 = arith.constant 1.000000e+00 : f32
    %cst_93 = arith.constant 0.000000e+00 : f32
    %181 = vector.broadcast %cst_92 : f32 to vector<1x512xf32>
    %182 = vector.broadcast %cst_93 : f32 to vector<1x512xf32>
    %183 = arith.select %180, %181, %182 : vector<1x512xi1>, vector<1x512xf32>
    %cst_94 = arith.constant 0.000000e+00 : f32
    %184 = vector.broadcast %cst_94 : f32 to vector<1x512xf32>
    %c0_95 = arith.constant 0 : index
    %185 = memref.load %arg3[%c0_95] : memref<98xf32, #tpu.memory_space<smem>>
    %c49 = arith.constant 49 : index
    %186 = memref.load %arg3[%c49] : memref<98xf32, #tpu.memory_space<smem>>
    %c0_96 = arith.constant 0 : index
    %c0_97 = arith.constant 0 : index
    %c77 = arith.constant 77 : index
    %187 = vector.load %arg5[%c0_96, %c0_97, %c77] : memref<2x1x768xf32, #tpu.memory_space<vmem>>, vector<1x1x512xf32>
    %188 = vector.shape_cast %187 : vector<1x1x512xf32> to vector<1x512xf32>
    %189 = vector.broadcast %185 : f32 to vector<1x512xf32>
    %190 = arith.mulf %188, %189 : vector<1x512xf32>
    %c1_98 = arith.constant 1 : index
    %c0_99 = arith.constant 0 : index
    %c77_100 = arith.constant 77 : index
    %191 = vector.load %arg5[%c1_98, %c0_99, %c77_100] : memref<2x1x768xf32, #tpu.memory_space<vmem>>, vector<1x1x512xf32>
    %192 = vector.shape_cast %191 : vector<1x1x512xf32> to vector<1x512xf32>
    %193 = vector.broadcast %186 : f32 to vector<1x512xf32>
    %194 = arith.mulf %192, %193 : vector<1x512xf32>
    %195 = arith.addf %190, %194 : vector<1x512xf32>
    %196 = arith.mulf %27, %111 : vector<1x512xf32>
    %197 = arith.mulf %195, %196 : vector<1x512xf32>
    %198 = arith.addf %184, %197 : vector<1x512xf32>
    %c1_101 = arith.constant 1 : index
    %199 = memref.load %arg3[%c1_101] : memref<98xf32, #tpu.memory_space<smem>>
    %c50 = arith.constant 50 : index
    %200 = memref.load %arg3[%c50] : memref<98xf32, #tpu.memory_space<smem>>
    %c0_102 = arith.constant 0 : index
    %c0_103 = arith.constant 0 : index
    %c78 = arith.constant 78 : index
    %201 = vector.load %arg5[%c0_102, %c0_103, %c78] : memref<2x1x768xf32, #tpu.memory_space<vmem>>, vector<1x1x512xf32>
    %202 = vector.shape_cast %201 : vector<1x1x512xf32> to vector<1x512xf32>
    %203 = vector.broadcast %199 : f32 to vector<1x512xf32>
    %204 = arith.mulf %202, %203 : vector<1x512xf32>
    %c1_104 = arith.constant 1 : index
    %c0_105 = arith.constant 0 : index
    %c78_106 = arith.constant 78 : index
    %205 = vector.load %arg5[%c1_104, %c0_105, %c78_106] : memref<2x1x768xf32, #tpu.memory_space<vmem>>, vector<1x1x512xf32>
    %206 = vector.shape_cast %205 : vector<1x1x512xf32> to vector<1x512xf32>
    %207 = vector.broadcast %200 : f32 to vector<1x512xf32>
    %208 = arith.mulf %206, %207 : vector<1x512xf32>
    %209 = arith.addf %204, %208 : vector<1x512xf32>
    %210 = arith.mulf %27, %123 : vector<1x512xf32>
    %211 = arith.mulf %209, %210 : vector<1x512xf32>
    %212 = arith.addf %198, %211 : vector<1x512xf32>
    %c2 = arith.constant 2 : index
    %213 = memref.load %arg3[%c2] : memref<98xf32, #tpu.memory_space<smem>>
    %c51 = arith.constant 51 : index
    %214 = memref.load %arg3[%c51] : memref<98xf32, #tpu.memory_space<smem>>
    %c0_107 = arith.constant 0 : index
    %c0_108 = arith.constant 0 : index
    %c79 = arith.constant 79 : index
    %215 = vector.load %arg5[%c0_107, %c0_108, %c79] : memref<2x1x768xf32, #tpu.memory_space<vmem>>, vector<1x1x512xf32>
    %216 = vector.shape_cast %215 : vector<1x1x512xf32> to vector<1x512xf32>
    %217 = vector.broadcast %213 : f32 to vector<1x512xf32>
    %218 = arith.mulf %216, %217 : vector<1x512xf32>
    %c1_109 = arith.constant 1 : index
    %c0_110 = arith.constant 0 : index
    %c79_111 = arith.constant 79 : index
    %219 = vector.load %arg5[%c1_109, %c0_110, %c79_111] : memref<2x1x768xf32, #tpu.memory_space<vmem>>, vector<1x1x512xf32>
    %220 = vector.shape_cast %219 : vector<1x1x512xf32> to vector<1x512xf32>
    %221 = vector.broadcast %214 : f32 to vector<1x512xf32>
    %222 = arith.mulf %220, %221 : vector<1x512xf32>
    %223 = arith.addf %218, %222 : vector<1x512xf32>
    %224 = arith.mulf %27, %135 : vector<1x512xf32>
    %225 = arith.mulf %223, %224 : vector<1x512xf32>
    %226 = arith.addf %212, %225 : vector<1x512xf32>
    %c3 = arith.constant 3 : index
    %227 = memref.load %arg3[%c3] : memref<98xf32, #tpu.memory_space<smem>>
    %c52 = arith.constant 52 : index
    %228 = memref.load %arg3[%c52] : memref<98xf32, #tpu.memory_space<smem>>
    %c0_112 = arith.constant 0 : index
    %c0_113 = arith.constant 0 : index
    %c80 = arith.constant 80 : index
    %229 = vector.load %arg5[%c0_112, %c0_113, %c80] : memref<2x1x768xf32, #tpu.memory_space<vmem>>, vector<1x1x512xf32>
    %230 = vector.shape_cast %229 : vector<1x1x512xf32> to vector<1x512xf32>
    %231 = vector.broadcast %227 : f32 to vector<1x512xf32>
    %232 = arith.mulf %230, %231 : vector<1x512xf32>
    %c1_114 = arith.constant 1 : index
    %c0_115 = arith.constant 0 : index
    %c80_116 = arith.constant 80 : index
    %233 = vector.load %arg5[%c1_114, %c0_115, %c80_116] : memref<2x1x768xf32, #tpu.memory_space<vmem>>, vector<1x1x512xf32>
    %234 = vector.shape_cast %233 : vector<1x1x512xf32> to vector<1x512xf32>
    %235 = vector.broadcast %228 : f32 to vector<1x512xf32>
    %236 = arith.mulf %234, %235 : vector<1x512xf32>
    %237 = arith.addf %232, %236 : vector<1x512xf32>
    %238 = arith.mulf %27, %147 : vector<1x512xf32>
    %239 = arith.mulf %237, %238 : vector<1x512xf32>
    %240 = arith.addf %226, %239 : vector<1x512xf32>
    %c4 = arith.constant 4 : index
    %241 = memref.load %arg3[%c4] : memref<98xf32, #tpu.memory_space<smem>>
    %c53 = arith.constant 53 : index
    %242 = memref.load %arg3[%c53] : memref<98xf32, #tpu.memory_space<smem>>
    %c0_117 = arith.constant 0 : index
    %c0_118 = arith.constant 0 : index
    %c81 = arith.constant 81 : index
    %243 = vector.load %arg5[%c0_117, %c0_118, %c81] : memref<2x1x768xf32, #tpu.memory_space<vmem>>, vector<1x1x512xf32>
    %244 = vector.shape_cast %243 : vector<1x1x512xf32> to vector<1x512xf32>
    %245 = vector.broadcast %241 : f32 to vector<1x512xf32>
    %246 = arith.mulf %244, %245 : vector<1x512xf32>
    %c1_119 = arith.constant 1 : index
    %c0_120 = arith.constant 0 : index
    %c81_121 = arith.constant 81 : index
    %247 = vector.load %arg5[%c1_119, %c0_120, %c81_121] : memref<2x1x768xf32, #tpu.memory_space<vmem>>, vector<1x1x512xf32>
    %248 = vector.shape_cast %247 : vector<1x1x512xf32> to vector<1x512xf32>
    %249 = vector.broadcast %242 : f32 to vector<1x512xf32>
    %250 = arith.mulf %248, %249 : vector<1x512xf32>
    %251 = arith.addf %246, %250 : vector<1x512xf32>
    %252 = arith.mulf %27, %159 : vector<1x512xf32>
    %253 = arith.mulf %251, %252 : vector<1x512xf32>
    %254 = arith.addf %240, %253 : vector<1x512xf32>
    %c5 = arith.constant 5 : index
    %255 = memref.load %arg3[%c5] : memref<98xf32, #tpu.memory_space<smem>>
    %c54 = arith.constant 54 : index
    %256 = memref.load %arg3[%c54] : memref<98xf32, #tpu.memory_space<smem>>
    %c0_122 = arith.constant 0 : index
    %c0_123 = arith.constant 0 : index
    %c82 = arith.constant 82 : index
    %257 = vector.load %arg5[%c0_122, %c0_123, %c82] : memref<2x1x768xf32, #tpu.memory_space<vmem>>, vector<1x1x512xf32>
    %258 = vector.shape_cast %257 : vector<1x1x512xf32> to vector<1x512xf32>
    %259 = vector.broadcast %255 : f32 to vector<1x512xf32>
    %260 = arith.mulf %258, %259 : vector<1x512xf32>
    %c1_124 = arith.constant 1 : index
    %c0_125 = arith.constant 0 : index
    %c82_126 = arith.constant 82 : index
    %261 = vector.load %arg5[%c1_124, %c0_125, %c82_126] : memref<2x1x768xf32, #tpu.memory_space<vmem>>, vector<1x1x512xf32>
    %262 = vector.shape_cast %261 : vector<1x1x512xf32> to vector<1x512xf32>
    %263 = vector.broadcast %256 : f32 to vector<1x512xf32>
    %264 = arith.mulf %262, %263 : vector<1x512xf32>
    %265 = arith.addf %260, %264 : vector<1x512xf32>
    %266 = arith.mulf %27, %171 : vector<1x512xf32>
    %267 = arith.mulf %265, %266 : vector<1x512xf32>
    %268 = arith.addf %254, %267 : vector<1x512xf32>
    %c6 = arith.constant 6 : index
    %269 = memref.load %arg3[%c6] : memref<98xf32, #tpu.memory_space<smem>>
    %c55 = arith.constant 55 : index
    %270 = memref.load %arg3[%c55] : memref<98xf32, #tpu.memory_space<smem>>
    %c0_127 = arith.constant 0 : index
    %c0_128 = arith.constant 0 : index
    %c83 = arith.constant 83 : index
    %271 = vector.load %arg5[%c0_127, %c0_128, %c83] : memref<2x1x768xf32, #tpu.memory_space<vmem>>, vector<1x1x512xf32>
    %272 = vector.shape_cast %271 : vector<1x1x512xf32> to vector<1x512xf32>
    %273 = vector.broadcast %269 : f32 to vector<1x512xf32>
    %274 = arith.mulf %272, %273 : vector<1x512xf32>
    %c1_129 = arith.constant 1 : index
    %c0_130 = arith.constant 0 : index
    %c83_131 = arith.constant 83 : index
    %275 = vector.load %arg5[%c1_129, %c0_130, %c83_131] : memref<2x1x768xf32, #tpu.memory_space<vmem>>, vector<1x1x512xf32>
    %276 = vector.shape_cast %275 : vector<1x1x512xf32> to vector<1x512xf32>
    %277 = vector.broadcast %270 : f32 to vector<1x512xf32>
    %278 = arith.mulf %276, %277 : vector<1x512xf32>
    %279 = arith.addf %274, %278 : vector<1x512xf32>
    %280 = arith.mulf %27, %183 : vector<1x512xf32>
    %281 = arith.mulf %279, %280 : vector<1x512xf32>
    %282 = arith.addf %268, %281 : vector<1x512xf32>
    %c7 = arith.constant 7 : index
    %283 = memref.load %arg3[%c7] : memref<98xf32, #tpu.memory_space<smem>>
    %c56 = arith.constant 56 : index
    %284 = memref.load %arg3[%c56] : memref<98xf32, #tpu.memory_space<smem>>
    %c0_132 = arith.constant 0 : index
    %c0_133 = arith.constant 0 : index
    %c93 = arith.constant 93 : index
    %285 = vector.load %arg5[%c0_132, %c0_133, %c93] : memref<2x1x768xf32, #tpu.memory_space<vmem>>, vector<1x1x512xf32>
    %286 = vector.shape_cast %285 : vector<1x1x512xf32> to vector<1x512xf32>
    %287 = vector.broadcast %283 : f32 to vector<1x512xf32>
    %288 = arith.mulf %286, %287 : vector<1x512xf32>
    %c1_134 = arith.constant 1 : index
    %c0_135 = arith.constant 0 : index
    %c93_136 = arith.constant 93 : index
    %289 = vector.load %arg5[%c1_134, %c0_135, %c93_136] : memref<2x1x768xf32, #tpu.memory_space<vmem>>, vector<1x1x512xf32>
    %290 = vector.shape_cast %289 : vector<1x1x512xf32> to vector<1x512xf32>
    %291 = vector.broadcast %284 : f32 to vector<1x512xf32>
    %292 = arith.mulf %290, %291 : vector<1x512xf32>
    %293 = arith.addf %288, %292 : vector<1x512xf32>
    %294 = arith.mulf %39, %111 : vector<1x512xf32>
    %295 = arith.mulf %293, %294 : vector<1x512xf32>
    %296 = arith.addf %282, %295 : vector<1x512xf32>
    %c8 = arith.constant 8 : index
    %297 = memref.load %arg3[%c8] : memref<98xf32, #tpu.memory_space<smem>>
    %c57 = arith.constant 57 : index
    %298 = memref.load %arg3[%c57] : memref<98xf32, #tpu.memory_space<smem>>
    %c0_137 = arith.constant 0 : index
    %c0_138 = arith.constant 0 : index
    %c94 = arith.constant 94 : index
    %299 = vector.load %arg5[%c0_137, %c0_138, %c94] : memref<2x1x768xf32, #tpu.memory_space<vmem>>, vector<1x1x512xf32>
    %300 = vector.shape_cast %299 : vector<1x1x512xf32> to vector<1x512xf32>
    %301 = vector.broadcast %297 : f32 to vector<1x512xf32>
    %302 = arith.mulf %300, %301 : vector<1x512xf32>
    %c1_139 = arith.constant 1 : index
    %c0_140 = arith.constant 0 : index
    %c94_141 = arith.constant 94 : index
    %303 = vector.load %arg5[%c1_139, %c0_140, %c94_141] : memref<2x1x768xf32, #tpu.memory_space<vmem>>, vector<1x1x512xf32>
    %304 = vector.shape_cast %303 : vector<1x1x512xf32> to vector<1x512xf32>
    %305 = vector.broadcast %298 : f32 to vector<1x512xf32>
    %306 = arith.mulf %304, %305 : vector<1x512xf32>
    %307 = arith.addf %302, %306 : vector<1x512xf32>
    %308 = arith.mulf %39, %123 : vector<1x512xf32>
    %309 = arith.mulf %307, %308 : vector<1x512xf32>
    %310 = arith.addf %296, %309 : vector<1x512xf32>
    %c9 = arith.constant 9 : index
    %311 = memref.load %arg3[%c9] : memref<98xf32, #tpu.memory_space<smem>>
    %c58 = arith.constant 58 : index
    %312 = memref.load %arg3[%c58] : memref<98xf32, #tpu.memory_space<smem>>
    %c0_142 = arith.constant 0 : index
    %c0_143 = arith.constant 0 : index
    %c95 = arith.constant 95 : index
    %313 = vector.load %arg5[%c0_142, %c0_143, %c95] : memref<2x1x768xf32, #tpu.memory_space<vmem>>, vector<1x1x512xf32>
    %314 = vector.shape_cast %313 : vector<1x1x512xf32> to vector<1x512xf32>
    %315 = vector.broadcast %311 : f32 to vector<1x512xf32>
    %316 = arith.mulf %314, %315 : vector<1x512xf32>
    %c1_144 = arith.constant 1 : index
    %c0_145 = arith.constant 0 : index
    %c95_146 = arith.constant 95 : index
    %317 = vector.load %arg5[%c1_144, %c0_145, %c95_146] : memref<2x1x768xf32, #tpu.memory_space<vmem>>, vector<1x1x512xf32>
    %318 = vector.shape_cast %317 : vector<1x1x512xf32> to vector<1x512xf32>
    %319 = vector.broadcast %312 : f32 to vector<1x512xf32>
    %320 = arith.mulf %318, %319 : vector<1x512xf32>
    %321 = arith.addf %316, %320 : vector<1x512xf32>
    %322 = arith.mulf %39, %135 : vector<1x512xf32>
    %323 = arith.mulf %321, %322 : vector<1x512xf32>
    %324 = arith.addf %310, %323 : vector<1x512xf32>
    %c10 = arith.constant 10 : index
    %325 = memref.load %arg3[%c10] : memref<98xf32, #tpu.memory_space<smem>>
    %c59 = arith.constant 59 : index
    %326 = memref.load %arg3[%c59] : memref<98xf32, #tpu.memory_space<smem>>
    %c0_147 = arith.constant 0 : index
    %c0_148 = arith.constant 0 : index
    %c96 = arith.constant 96 : index
    %327 = vector.load %arg5[%c0_147, %c0_148, %c96] : memref<2x1x768xf32, #tpu.memory_space<vmem>>, vector<1x1x512xf32>
    %328 = vector.shape_cast %327 : vector<1x1x512xf32> to vector<1x512xf32>
    %329 = vector.broadcast %325 : f32 to vector<1x512xf32>
    %330 = arith.mulf %328, %329 : vector<1x512xf32>
    %c1_149 = arith.constant 1 : index
    %c0_150 = arith.constant 0 : index
    %c96_151 = arith.constant 96 : index
    %331 = vector.load %arg5[%c1_149, %c0_150, %c96_151] : memref<2x1x768xf32, #tpu.memory_space<vmem>>, vector<1x1x512xf32>
    %332 = vector.shape_cast %331 : vector<1x1x512xf32> to vector<1x512xf32>
    %333 = vector.broadcast %326 : f32 to vector<1x512xf32>
    %334 = arith.mulf %332, %333 : vector<1x512xf32>
    %335 = arith.addf %330, %334 : vector<1x512xf32>
    %336 = arith.mulf %39, %147 : vector<1x512xf32>
    %337 = arith.mulf %335, %336 : vector<1x512xf32>
    %338 = arith.addf %324, %337 : vector<1x512xf32>
    %c11 = arith.constant 11 : index
    %339 = memref.load %arg3[%c11] : memref<98xf32, #tpu.memory_space<smem>>
    %c60 = arith.constant 60 : index
    %340 = memref.load %arg3[%c60] : memref<98xf32, #tpu.memory_space<smem>>
    %c0_152 = arith.constant 0 : index
    %c0_153 = arith.constant 0 : index
    %c97 = arith.constant 97 : index
    %341 = vector.load %arg5[%c0_152, %c0_153, %c97] : memref<2x1x768xf32, #tpu.memory_space<vmem>>, vector<1x1x512xf32>
    %342 = vector.shape_cast %341 : vector<1x1x512xf32> to vector<1x512xf32>
    %343 = vector.broadcast %339 : f32 to vector<1x512xf32>
    %344 = arith.mulf %342, %343 : vector<1x512xf32>
    %c1_154 = arith.constant 1 : index
    %c0_155 = arith.constant 0 : index
    %c97_156 = arith.constant 97 : index
    %345 = vector.load %arg5[%c1_154, %c0_155, %c97_156] : memref<2x1x768xf32, #tpu.memory_space<vmem>>, vector<1x1x512xf32>
    %346 = vector.shape_cast %345 : vector<1x1x512xf32> to vector<1x512xf32>
    %347 = vector.broadcast %340 : f32 to vector<1x512xf32>
    %348 = arith.mulf %346, %347 : vector<1x512xf32>
    %349 = arith.addf %344, %348 : vector<1x512xf32>
    %350 = arith.mulf %39, %159 : vector<1x512xf32>
    %351 = arith.mulf %349, %350 : vector<1x512xf32>
    %352 = arith.addf %338, %351 : vector<1x512xf32>
    %c12 = arith.constant 12 : index
    %353 = memref.load %arg3[%c12] : memref<98xf32, #tpu.memory_space<smem>>
    %c61 = arith.constant 61 : index
    %354 = memref.load %arg3[%c61] : memref<98xf32, #tpu.memory_space<smem>>
    %c0_157 = arith.constant 0 : index
    %c0_158 = arith.constant 0 : index
    %c98 = arith.constant 98 : index
    %355 = vector.load %arg5[%c0_157, %c0_158, %c98] : memref<2x1x768xf32, #tpu.memory_space<vmem>>, vector<1x1x512xf32>
    %356 = vector.shape_cast %355 : vector<1x1x512xf32> to vector<1x512xf32>
    %357 = vector.broadcast %353 : f32 to vector<1x512xf32>
    %358 = arith.mulf %356, %357 : vector<1x512xf32>
    %c1_159 = arith.constant 1 : index
    %c0_160 = arith.constant 0 : index
    %c98_161 = arith.constant 98 : index
    %359 = vector.load %arg5[%c1_159, %c0_160, %c98_161] : memref<2x1x768xf32, #tpu.memory_space<vmem>>, vector<1x1x512xf32>
    %360 = vector.shape_cast %359 : vector<1x1x512xf32> to vector<1x512xf32>
    %361 = vector.broadcast %354 : f32 to vector<1x512xf32>
    %362 = arith.mulf %360, %361 : vector<1x512xf32>
    %363 = arith.addf %358, %362 : vector<1x512xf32>
    %364 = arith.mulf %39, %171 : vector<1x512xf32>
    %365 = arith.mulf %363, %364 : vector<1x512xf32>
    %366 = arith.addf %352, %365 : vector<1x512xf32>
    %c13 = arith.constant 13 : index
    %367 = memref.load %arg3[%c13] : memref<98xf32, #tpu.memory_space<smem>>
    %c62 = arith.constant 62 : index
    %368 = memref.load %arg3[%c62] : memref<98xf32, #tpu.memory_space<smem>>
    %c0_162 = arith.constant 0 : index
    %c0_163 = arith.constant 0 : index
    %c99 = arith.constant 99 : index
    %369 = vector.load %arg5[%c0_162, %c0_163, %c99] : memref<2x1x768xf32, #tpu.memory_space<vmem>>, vector<1x1x512xf32>
    %370 = vector.shape_cast %369 : vector<1x1x512xf32> to vector<1x512xf32>
    %371 = vector.broadcast %367 : f32 to vector<1x512xf32>
    %372 = arith.mulf %370, %371 : vector<1x512xf32>
    %c1_164 = arith.constant 1 : index
    %c0_165 = arith.constant 0 : index
    %c99_166 = arith.constant 99 : index
    %373 = vector.load %arg5[%c1_164, %c0_165, %c99_166] : memref<2x1x768xf32, #tpu.memory_space<vmem>>, vector<1x1x512xf32>
    %374 = vector.shape_cast %373 : vector<1x1x512xf32> to vector<1x512xf32>
    %375 = vector.broadcast %368 : f32 to vector<1x512xf32>
    %376 = arith.mulf %374, %375 : vector<1x512xf32>
    %377 = arith.addf %372, %376 : vector<1x512xf32>
    %378 = arith.mulf %39, %183 : vector<1x512xf32>
    %379 = arith.mulf %377, %378 : vector<1x512xf32>
    %380 = arith.addf %366, %379 : vector<1x512xf32>
    %c14 = arith.constant 14 : index
    %381 = memref.load %arg3[%c14] : memref<98xf32, #tpu.memory_space<smem>>
    %c63 = arith.constant 63 : index
    %382 = memref.load %arg3[%c63] : memref<98xf32, #tpu.memory_space<smem>>
    %c0_167 = arith.constant 0 : index
    %c0_168 = arith.constant 0 : index
    %c109 = arith.constant 109 : index
    %383 = vector.load %arg5[%c0_167, %c0_168, %c109] : memref<2x1x768xf32, #tpu.memory_space<vmem>>, vector<1x1x512xf32>
    %384 = vector.shape_cast %383 : vector<1x1x512xf32> to vector<1x512xf32>
    %385 = vector.broadcast %381 : f32 to vector<1x512xf32>
    %386 = arith.mulf %384, %385 : vector<1x512xf32>
    %c1_169 = arith.constant 1 : index
    %c0_170 = arith.constant 0 : index
    %c109_171 = arith.constant 109 : index
    %387 = vector.load %arg5[%c1_169, %c0_170, %c109_171] : memref<2x1x768xf32, #tpu.memory_space<vmem>>, vector<1x1x512xf32>
    %388 = vector.shape_cast %387 : vector<1x1x512xf32> to vector<1x512xf32>
    %389 = vector.broadcast %382 : f32 to vector<1x512xf32>
    %390 = arith.mulf %388, %389 : vector<1x512xf32>
    %391 = arith.addf %386, %390 : vector<1x512xf32>
    %392 = arith.mulf %51, %111 : vector<1x512xf32>
    %393 = arith.mulf %391, %392 : vector<1x512xf32>
    %394 = arith.addf %380, %393 : vector<1x512xf32>
    %c15 = arith.constant 15 : index
    %395 = memref.load %arg3[%c15] : memref<98xf32, #tpu.memory_space<smem>>
    %c64 = arith.constant 64 : index
    %396 = memref.load %arg3[%c64] : memref<98xf32, #tpu.memory_space<smem>>
    %c0_172 = arith.constant 0 : index
    %c0_173 = arith.constant 0 : index
    %c110 = arith.constant 110 : index
    %397 = vector.load %arg5[%c0_172, %c0_173, %c110] : memref<2x1x768xf32, #tpu.memory_space<vmem>>, vector<1x1x512xf32>
    %398 = vector.shape_cast %397 : vector<1x1x512xf32> to vector<1x512xf32>
    %399 = vector.broadcast %395 : f32 to vector<1x512xf32>
    %400 = arith.mulf %398, %399 : vector<1x512xf32>
    %c1_174 = arith.constant 1 : index
    %c0_175 = arith.constant 0 : index
    %c110_176 = arith.constant 110 : index
    %401 = vector.load %arg5[%c1_174, %c0_175, %c110_176] : memref<2x1x768xf32, #tpu.memory_space<vmem>>, vector<1x1x512xf32>
    %402 = vector.shape_cast %401 : vector<1x1x512xf32> to vector<1x512xf32>
    %403 = vector.broadcast %396 : f32 to vector<1x512xf32>
    %404 = arith.mulf %402, %403 : vector<1x512xf32>
    %405 = arith.addf %400, %404 : vector<1x512xf32>
    %406 = arith.mulf %51, %123 : vector<1x512xf32>
    %407 = arith.mulf %405, %406 : vector<1x512xf32>
    %408 = arith.addf %394, %407 : vector<1x512xf32>
    %c16 = arith.constant 16 : index
    %409 = memref.load %arg3[%c16] : memref<98xf32, #tpu.memory_space<smem>>
    %c65 = arith.constant 65 : index
    %410 = memref.load %arg3[%c65] : memref<98xf32, #tpu.memory_space<smem>>
    %c0_177 = arith.constant 0 : index
    %c0_178 = arith.constant 0 : index
    %c111 = arith.constant 111 : index
    %411 = vector.load %arg5[%c0_177, %c0_178, %c111] : memref<2x1x768xf32, #tpu.memory_space<vmem>>, vector<1x1x512xf32>
    %412 = vector.shape_cast %411 : vector<1x1x512xf32> to vector<1x512xf32>
    %413 = vector.broadcast %409 : f32 to vector<1x512xf32>
    %414 = arith.mulf %412, %413 : vector<1x512xf32>
    %c1_179 = arith.constant 1 : index
    %c0_180 = arith.constant 0 : index
    %c111_181 = arith.constant 111 : index
    %415 = vector.load %arg5[%c1_179, %c0_180, %c111_181] : memref<2x1x768xf32, #tpu.memory_space<vmem>>, vector<1x1x512xf32>
    %416 = vector.shape_cast %415 : vector<1x1x512xf32> to vector<1x512xf32>
    %417 = vector.broadcast %410 : f32 to vector<1x512xf32>
    %418 = arith.mulf %416, %417 : vector<1x512xf32>
    %419 = arith.addf %414, %418 : vector<1x512xf32>
    %420 = arith.mulf %51, %135 : vector<1x512xf32>
    %421 = arith.mulf %419, %420 : vector<1x512xf32>
    %422 = arith.addf %408, %421 : vector<1x512xf32>
    %c17 = arith.constant 17 : index
    %423 = memref.load %arg3[%c17] : memref<98xf32, #tpu.memory_space<smem>>
    %c66 = arith.constant 66 : index
    %424 = memref.load %arg3[%c66] : memref<98xf32, #tpu.memory_space<smem>>
    %c0_182 = arith.constant 0 : index
    %c0_183 = arith.constant 0 : index
    %c112 = arith.constant 112 : index
    %425 = vector.load %arg5[%c0_182, %c0_183, %c112] : memref<2x1x768xf32, #tpu.memory_space<vmem>>, vector<1x1x512xf32>
    %426 = vector.shape_cast %425 : vector<1x1x512xf32> to vector<1x512xf32>
    %427 = vector.broadcast %423 : f32 to vector<1x512xf32>
    %428 = arith.mulf %426, %427 : vector<1x512xf32>
    %c1_184 = arith.constant 1 : index
    %c0_185 = arith.constant 0 : index
    %c112_186 = arith.constant 112 : index
    %429 = vector.load %arg5[%c1_184, %c0_185, %c112_186] : memref<2x1x768xf32, #tpu.memory_space<vmem>>, vector<1x1x512xf32>
    %430 = vector.shape_cast %429 : vector<1x1x512xf32> to vector<1x512xf32>
    %431 = vector.broadcast %424 : f32 to vector<1x512xf32>
    %432 = arith.mulf %430, %431 : vector<1x512xf32>
    %433 = arith.addf %428, %432 : vector<1x512xf32>
    %434 = arith.mulf %51, %147 : vector<1x512xf32>
    %435 = arith.mulf %433, %434 : vector<1x512xf32>
    %436 = arith.addf %422, %435 : vector<1x512xf32>
    %c18 = arith.constant 18 : index
    %437 = memref.load %arg3[%c18] : memref<98xf32, #tpu.memory_space<smem>>
    %c67 = arith.constant 67 : index
    %438 = memref.load %arg3[%c67] : memref<98xf32, #tpu.memory_space<smem>>
    %c0_187 = arith.constant 0 : index
    %c0_188 = arith.constant 0 : index
    %c113 = arith.constant 113 : index
    %439 = vector.load %arg5[%c0_187, %c0_188, %c113] : memref<2x1x768xf32, #tpu.memory_space<vmem>>, vector<1x1x512xf32>
    %440 = vector.shape_cast %439 : vector<1x1x512xf32> to vector<1x512xf32>
    %441 = vector.broadcast %437 : f32 to vector<1x512xf32>
    %442 = arith.mulf %440, %441 : vector<1x512xf32>
    %c1_189 = arith.constant 1 : index
    %c0_190 = arith.constant 0 : index
    %c113_191 = arith.constant 113 : index
    %443 = vector.load %arg5[%c1_189, %c0_190, %c113_191] : memref<2x1x768xf32, #tpu.memory_space<vmem>>, vector<1x1x512xf32>
    %444 = vector.shape_cast %443 : vector<1x1x512xf32> to vector<1x512xf32>
    %445 = vector.broadcast %438 : f32 to vector<1x512xf32>
    %446 = arith.mulf %444, %445 : vector<1x512xf32>
    %447 = arith.addf %442, %446 : vector<1x512xf32>
    %448 = arith.mulf %51, %159 : vector<1x512xf32>
    %449 = arith.mulf %447, %448 : vector<1x512xf32>
    %450 = arith.addf %436, %449 : vector<1x512xf32>
    %c19 = arith.constant 19 : index
    %451 = memref.load %arg3[%c19] : memref<98xf32, #tpu.memory_space<smem>>
    %c68 = arith.constant 68 : index
    %452 = memref.load %arg3[%c68] : memref<98xf32, #tpu.memory_space<smem>>
    %c0_192 = arith.constant 0 : index
    %c0_193 = arith.constant 0 : index
    %c114 = arith.constant 114 : index
    %453 = vector.load %arg5[%c0_192, %c0_193, %c114] : memref<2x1x768xf32, #tpu.memory_space<vmem>>, vector<1x1x512xf32>
    %454 = vector.shape_cast %453 : vector<1x1x512xf32> to vector<1x512xf32>
    %455 = vector.broadcast %451 : f32 to vector<1x512xf32>
    %456 = arith.mulf %454, %455 : vector<1x512xf32>
    %c1_194 = arith.constant 1 : index
    %c0_195 = arith.constant 0 : index
    %c114_196 = arith.constant 114 : index
    %457 = vector.load %arg5[%c1_194, %c0_195, %c114_196] : memref<2x1x768xf32, #tpu.memory_space<vmem>>, vector<1x1x512xf32>
    %458 = vector.shape_cast %457 : vector<1x1x512xf32> to vector<1x512xf32>
    %459 = vector.broadcast %452 : f32 to vector<1x512xf32>
    %460 = arith.mulf %458, %459 : vector<1x512xf32>
    %461 = arith.addf %456, %460 : vector<1x512xf32>
    %462 = arith.mulf %51, %171 : vector<1x512xf32>
    %463 = arith.mulf %461, %462 : vector<1x512xf32>
    %464 = arith.addf %450, %463 : vector<1x512xf32>
    %c20 = arith.constant 20 : index
    %465 = memref.load %arg3[%c20] : memref<98xf32, #tpu.memory_space<smem>>
    %c69 = arith.constant 69 : index
    %466 = memref.load %arg3[%c69] : memref<98xf32, #tpu.memory_space<smem>>
    %c0_197 = arith.constant 0 : index
    %c0_198 = arith.constant 0 : index
    %c115 = arith.constant 115 : index
    %467 = vector.load %arg5[%c0_197, %c0_198, %c115] : memref<2x1x768xf32, #tpu.memory_space<vmem>>, vector<1x1x512xf32>
    %468 = vector.shape_cast %467 : vector<1x1x512xf32> to vector<1x512xf32>
    %469 = vector.broadcast %465 : f32 to vector<1x512xf32>
    %470 = arith.mulf %468, %469 : vector<1x512xf32>
    %c1_199 = arith.constant 1 : index
    %c0_200 = arith.constant 0 : index
    %c115_201 = arith.constant 115 : index
    %471 = vector.load %arg5[%c1_199, %c0_200, %c115_201] : memref<2x1x768xf32, #tpu.memory_space<vmem>>, vector<1x1x512xf32>
    %472 = vector.shape_cast %471 : vector<1x1x512xf32> to vector<1x512xf32>
    %473 = vector.broadcast %466 : f32 to vector<1x512xf32>
    %474 = arith.mulf %472, %473 : vector<1x512xf32>
    %475 = arith.addf %470, %474 : vector<1x512xf32>
    %476 = arith.mulf %51, %183 : vector<1x512xf32>
    %477 = arith.mulf %475, %476 : vector<1x512xf32>
    %478 = arith.addf %464, %477 : vector<1x512xf32>
    %c21 = arith.constant 21 : index
    %479 = memref.load %arg3[%c21] : memref<98xf32, #tpu.memory_space<smem>>
    %c70 = arith.constant 70 : index
    %480 = memref.load %arg3[%c70] : memref<98xf32, #tpu.memory_space<smem>>
    %c0_202 = arith.constant 0 : index
    %c0_203 = arith.constant 0 : index
    %c125 = arith.constant 125 : index
    %481 = vector.load %arg5[%c0_202, %c0_203, %c125] : memref<2x1x768xf32, #tpu.memory_space<vmem>>, vector<1x1x512xf32>
    %482 = vector.shape_cast %481 : vector<1x1x512xf32> to vector<1x512xf32>
    %483 = vector.broadcast %479 : f32 to vector<1x512xf32>
    %484 = arith.mulf %482, %483 : vector<1x512xf32>
    %c1_204 = arith.constant 1 : index
    %c0_205 = arith.constant 0 : index
    %c125_206 = arith.constant 125 : index
    %485 = vector.load %arg5[%c1_204, %c0_205, %c125_206] : memref<2x1x768xf32, #tpu.memory_space<vmem>>, vector<1x1x512xf32>
    %486 = vector.shape_cast %485 : vector<1x1x512xf32> to vector<1x512xf32>
    %487 = vector.broadcast %480 : f32 to vector<1x512xf32>
    %488 = arith.mulf %486, %487 : vector<1x512xf32>
    %489 = arith.addf %484, %488 : vector<1x512xf32>
    %490 = arith.mulf %63, %111 : vector<1x512xf32>
    %491 = arith.mulf %489, %490 : vector<1x512xf32>
    %492 = arith.addf %478, %491 : vector<1x512xf32>
    %c22 = arith.constant 22 : index
    %493 = memref.load %arg3[%c22] : memref<98xf32, #tpu.memory_space<smem>>
    %c71 = arith.constant 71 : index
    %494 = memref.load %arg3[%c71] : memref<98xf32, #tpu.memory_space<smem>>
    %c0_207 = arith.constant 0 : index
    %c0_208 = arith.constant 0 : index
    %c126 = arith.constant 126 : index
    %495 = vector.load %arg5[%c0_207, %c0_208, %c126] : memref<2x1x768xf32, #tpu.memory_space<vmem>>, vector<1x1x512xf32>
    %496 = vector.shape_cast %495 : vector<1x1x512xf32> to vector<1x512xf32>
    %497 = vector.broadcast %493 : f32 to vector<1x512xf32>
    %498 = arith.mulf %496, %497 : vector<1x512xf32>
    %c1_209 = arith.constant 1 : index
    %c0_210 = arith.constant 0 : index
    %c126_211 = arith.constant 126 : index
    %499 = vector.load %arg5[%c1_209, %c0_210, %c126_211] : memref<2x1x768xf32, #tpu.memory_space<vmem>>, vector<1x1x512xf32>
    %500 = vector.shape_cast %499 : vector<1x1x512xf32> to vector<1x512xf32>
    %501 = vector.broadcast %494 : f32 to vector<1x512xf32>
    %502 = arith.mulf %500, %501 : vector<1x512xf32>
    %503 = arith.addf %498, %502 : vector<1x512xf32>
    %504 = arith.mulf %63, %123 : vector<1x512xf32>
    %505 = arith.mulf %503, %504 : vector<1x512xf32>
    %506 = arith.addf %492, %505 : vector<1x512xf32>
    %c23 = arith.constant 23 : index
    %507 = memref.load %arg3[%c23] : memref<98xf32, #tpu.memory_space<smem>>
    %c72 = arith.constant 72 : index
    %508 = memref.load %arg3[%c72] : memref<98xf32, #tpu.memory_space<smem>>
    %c0_212 = arith.constant 0 : index
    %c0_213 = arith.constant 0 : index
    %c127 = arith.constant 127 : index
    %509 = vector.load %arg5[%c0_212, %c0_213, %c127] : memref<2x1x768xf32, #tpu.memory_space<vmem>>, vector<1x1x512xf32>
    %510 = vector.shape_cast %509 : vector<1x1x512xf32> to vector<1x512xf32>
    %511 = vector.broadcast %507 : f32 to vector<1x512xf32>
    %512 = arith.mulf %510, %511 : vector<1x512xf32>
    %c1_214 = arith.constant 1 : index
    %c0_215 = arith.constant 0 : index
    %c127_216 = arith.constant 127 : index
    %513 = vector.load %arg5[%c1_214, %c0_215, %c127_216] : memref<2x1x768xf32, #tpu.memory_space<vmem>>, vector<1x1x512xf32>
    %514 = vector.shape_cast %513 : vector<1x1x512xf32> to vector<1x512xf32>
    %515 = vector.broadcast %508 : f32 to vector<1x512xf32>
    %516 = arith.mulf %514, %515 : vector<1x512xf32>
    %517 = arith.addf %512, %516 : vector<1x512xf32>
    %518 = arith.mulf %63, %135 : vector<1x512xf32>
    %519 = arith.mulf %517, %518 : vector<1x512xf32>
    %520 = arith.addf %506, %519 : vector<1x512xf32>
    %c24 = arith.constant 24 : index
    %521 = memref.load %arg3[%c24] : memref<98xf32, #tpu.memory_space<smem>>
    %c73 = arith.constant 73 : index
    %522 = memref.load %arg3[%c73] : memref<98xf32, #tpu.memory_space<smem>>
    %c0_217 = arith.constant 0 : index
    %c0_218 = arith.constant 0 : index
    %c128_219 = arith.constant 128 : index
    %523 = vector.load %arg5[%c0_217, %c0_218, %c128_219] : memref<2x1x768xf32, #tpu.memory_space<vmem>>, vector<1x1x512xf32>
    %524 = vector.shape_cast %523 : vector<1x1x512xf32> to vector<1x512xf32>
    %525 = vector.broadcast %521 : f32 to vector<1x512xf32>
    %526 = arith.mulf %524, %525 : vector<1x512xf32>
    %c1_220 = arith.constant 1 : index
    %c0_221 = arith.constant 0 : index
    %c128_222 = arith.constant 128 : index
    %527 = vector.load %arg5[%c1_220, %c0_221, %c128_222] : memref<2x1x768xf32, #tpu.memory_space<vmem>>, vector<1x1x512xf32>
    %528 = vector.shape_cast %527 : vector<1x1x512xf32> to vector<1x512xf32>
    %529 = vector.broadcast %522 : f32 to vector<1x512xf32>
    %530 = arith.mulf %528, %529 : vector<1x512xf32>
    %531 = arith.addf %526, %530 : vector<1x512xf32>
    %532 = arith.mulf %63, %147 : vector<1x512xf32>
    %533 = arith.mulf %531, %532 : vector<1x512xf32>
    %534 = arith.addf %520, %533 : vector<1x512xf32>
    %c25 = arith.constant 25 : index
    %535 = memref.load %arg3[%c25] : memref<98xf32, #tpu.memory_space<smem>>
    %c74 = arith.constant 74 : index
    %536 = memref.load %arg3[%c74] : memref<98xf32, #tpu.memory_space<smem>>
    %c0_223 = arith.constant 0 : index
    %c0_224 = arith.constant 0 : index
    %c129 = arith.constant 129 : index
    %537 = vector.load %arg5[%c0_223, %c0_224, %c129] : memref<2x1x768xf32, #tpu.memory_space<vmem>>, vector<1x1x512xf32>
    %538 = vector.shape_cast %537 : vector<1x1x512xf32> to vector<1x512xf32>
    %539 = vector.broadcast %535 : f32 to vector<1x512xf32>
    %540 = arith.mulf %538, %539 : vector<1x512xf32>
    %c1_225 = arith.constant 1 : index
    %c0_226 = arith.constant 0 : index
    %c129_227 = arith.constant 129 : index
    %541 = vector.load %arg5[%c1_225, %c0_226, %c129_227] : memref<2x1x768xf32, #tpu.memory_space<vmem>>, vector<1x1x512xf32>
    %542 = vector.shape_cast %541 : vector<1x1x512xf32> to vector<1x512xf32>
    %543 = vector.broadcast %536 : f32 to vector<1x512xf32>
    %544 = arith.mulf %542, %543 : vector<1x512xf32>
    %545 = arith.addf %540, %544 : vector<1x512xf32>
    %546 = arith.mulf %63, %159 : vector<1x512xf32>
    %547 = arith.mulf %545, %546 : vector<1x512xf32>
    %548 = arith.addf %534, %547 : vector<1x512xf32>
    %c26 = arith.constant 26 : index
    %549 = memref.load %arg3[%c26] : memref<98xf32, #tpu.memory_space<smem>>
    %c75 = arith.constant 75 : index
    %550 = memref.load %arg3[%c75] : memref<98xf32, #tpu.memory_space<smem>>
    %c0_228 = arith.constant 0 : index
    %c0_229 = arith.constant 0 : index
    %c130 = arith.constant 130 : index
    %551 = vector.load %arg5[%c0_228, %c0_229, %c130] : memref<2x1x768xf32, #tpu.memory_space<vmem>>, vector<1x1x512xf32>
    %552 = vector.shape_cast %551 : vector<1x1x512xf32> to vector<1x512xf32>
    %553 = vector.broadcast %549 : f32 to vector<1x512xf32>
    %554 = arith.mulf %552, %553 : vector<1x512xf32>
    %c1_230 = arith.constant 1 : index
    %c0_231 = arith.constant 0 : index
    %c130_232 = arith.constant 130 : index
    %555 = vector.load %arg5[%c1_230, %c0_231, %c130_232] : memref<2x1x768xf32, #tpu.memory_space<vmem>>, vector<1x1x512xf32>
    %556 = vector.shape_cast %555 : vector<1x1x512xf32> to vector<1x512xf32>
    %557 = vector.broadcast %550 : f32 to vector<1x512xf32>
    %558 = arith.mulf %556, %557 : vector<1x512xf32>
    %559 = arith.addf %554, %558 : vector<1x512xf32>
    %560 = arith.mulf %63, %171 : vector<1x512xf32>
    %561 = arith.mulf %559, %560 : vector<1x512xf32>
    %562 = arith.addf %548, %561 : vector<1x512xf32>
    %c27 = arith.constant 27 : index
    %563 = memref.load %arg3[%c27] : memref<98xf32, #tpu.memory_space<smem>>
    %c76 = arith.constant 76 : index
    %564 = memref.load %arg3[%c76] : memref<98xf32, #tpu.memory_space<smem>>
    %c0_233 = arith.constant 0 : index
    %c0_234 = arith.constant 0 : index
    %c131 = arith.constant 131 : index
    %565 = vector.load %arg5[%c0_233, %c0_234, %c131] : memref<2x1x768xf32, #tpu.memory_space<vmem>>, vector<1x1x512xf32>
    %566 = vector.shape_cast %565 : vector<1x1x512xf32> to vector<1x512xf32>
    %567 = vector.broadcast %563 : f32 to vector<1x512xf32>
    %568 = arith.mulf %566, %567 : vector<1x512xf32>
    %c1_235 = arith.constant 1 : index
    %c0_236 = arith.constant 0 : index
    %c131_237 = arith.constant 131 : index
    %569 = vector.load %arg5[%c1_235, %c0_236, %c131_237] : memref<2x1x768xf32, #tpu.memory_space<vmem>>, vector<1x1x512xf32>
    %570 = vector.shape_cast %569 : vector<1x1x512xf32> to vector<1x512xf32>
    %571 = vector.broadcast %564 : f32 to vector<1x512xf32>
    %572 = arith.mulf %570, %571 : vector<1x512xf32>
    %573 = arith.addf %568, %572 : vector<1x512xf32>
    %574 = arith.mulf %63, %183 : vector<1x512xf32>
    %575 = arith.mulf %573, %574 : vector<1x512xf32>
    %576 = arith.addf %562, %575 : vector<1x512xf32>
    %c28 = arith.constant 28 : index
    %577 = memref.load %arg3[%c28] : memref<98xf32, #tpu.memory_space<smem>>
    %c77_238 = arith.constant 77 : index
    %578 = memref.load %arg3[%c77_238] : memref<98xf32, #tpu.memory_space<smem>>
    %c0_239 = arith.constant 0 : index
    %c0_240 = arith.constant 0 : index
    %c141 = arith.constant 141 : index
    %579 = vector.load %arg5[%c0_239, %c0_240, %c141] : memref<2x1x768xf32, #tpu.memory_space<vmem>>, vector<1x1x512xf32>
    %580 = vector.shape_cast %579 : vector<1x1x512xf32> to vector<1x512xf32>
    %581 = vector.broadcast %577 : f32 to vector<1x512xf32>
    %582 = arith.mulf %580, %581 : vector<1x512xf32>
    %c1_241 = arith.constant 1 : index
    %c0_242 = arith.constant 0 : index
    %c141_243 = arith.constant 141 : index
    %583 = vector.load %arg5[%c1_241, %c0_242, %c141_243] : memref<2x1x768xf32, #tpu.memory_space<vmem>>, vector<1x1x512xf32>
    %584 = vector.shape_cast %583 : vector<1x1x512xf32> to vector<1x512xf32>
    %585 = vector.broadcast %578 : f32 to vector<1x512xf32>
    %586 = arith.mulf %584, %585 : vector<1x512xf32>
    %587 = arith.addf %582, %586 : vector<1x512xf32>
    %588 = arith.mulf %75, %111 : vector<1x512xf32>
    %589 = arith.mulf %587, %588 : vector<1x512xf32>
    %590 = arith.addf %576, %589 : vector<1x512xf32>
    %c29 = arith.constant 29 : index
    %591 = memref.load %arg3[%c29] : memref<98xf32, #tpu.memory_space<smem>>
    %c78_244 = arith.constant 78 : index
    %592 = memref.load %arg3[%c78_244] : memref<98xf32, #tpu.memory_space<smem>>
    %c0_245 = arith.constant 0 : index
    %c0_246 = arith.constant 0 : index
    %c142 = arith.constant 142 : index
    %593 = vector.load %arg5[%c0_245, %c0_246, %c142] : memref<2x1x768xf32, #tpu.memory_space<vmem>>, vector<1x1x512xf32>
    %594 = vector.shape_cast %593 : vector<1x1x512xf32> to vector<1x512xf32>
    %595 = vector.broadcast %591 : f32 to vector<1x512xf32>
    %596 = arith.mulf %594, %595 : vector<1x512xf32>
    %c1_247 = arith.constant 1 : index
    %c0_248 = arith.constant 0 : index
    %c142_249 = arith.constant 142 : index
    %597 = vector.load %arg5[%c1_247, %c0_248, %c142_249] : memref<2x1x768xf32, #tpu.memory_space<vmem>>, vector<1x1x512xf32>
    %598 = vector.shape_cast %597 : vector<1x1x512xf32> to vector<1x512xf32>
    %599 = vector.broadcast %592 : f32 to vector<1x512xf32>
    %600 = arith.mulf %598, %599 : vector<1x512xf32>
    %601 = arith.addf %596, %600 : vector<1x512xf32>
    %602 = arith.mulf %75, %123 : vector<1x512xf32>
    %603 = arith.mulf %601, %602 : vector<1x512xf32>
    %604 = arith.addf %590, %603 : vector<1x512xf32>
    %c30 = arith.constant 30 : index
    %605 = memref.load %arg3[%c30] : memref<98xf32, #tpu.memory_space<smem>>
    %c79_250 = arith.constant 79 : index
    %606 = memref.load %arg3[%c79_250] : memref<98xf32, #tpu.memory_space<smem>>
    %c0_251 = arith.constant 0 : index
    %c0_252 = arith.constant 0 : index
    %c143 = arith.constant 143 : index
    %607 = vector.load %arg5[%c0_251, %c0_252, %c143] : memref<2x1x768xf32, #tpu.memory_space<vmem>>, vector<1x1x512xf32>
    %608 = vector.shape_cast %607 : vector<1x1x512xf32> to vector<1x512xf32>
    %609 = vector.broadcast %605 : f32 to vector<1x512xf32>
    %610 = arith.mulf %608, %609 : vector<1x512xf32>
    %c1_253 = arith.constant 1 : index
    %c0_254 = arith.constant 0 : index
    %c143_255 = arith.constant 143 : index
    %611 = vector.load %arg5[%c1_253, %c0_254, %c143_255] : memref<2x1x768xf32, #tpu.memory_space<vmem>>, vector<1x1x512xf32>
    %612 = vector.shape_cast %611 : vector<1x1x512xf32> to vector<1x512xf32>
    %613 = vector.broadcast %606 : f32 to vector<1x512xf32>
    %614 = arith.mulf %612, %613 : vector<1x512xf32>
    %615 = arith.addf %610, %614 : vector<1x512xf32>
    %616 = arith.mulf %75, %135 : vector<1x512xf32>
    %617 = arith.mulf %615, %616 : vector<1x512xf32>
    %618 = arith.addf %604, %617 : vector<1x512xf32>
    %c31 = arith.constant 31 : index
    %619 = memref.load %arg3[%c31] : memref<98xf32, #tpu.memory_space<smem>>
    %c80_256 = arith.constant 80 : index
    %620 = memref.load %arg3[%c80_256] : memref<98xf32, #tpu.memory_space<smem>>
    %c0_257 = arith.constant 0 : index
    %c0_258 = arith.constant 0 : index
    %c144 = arith.constant 144 : index
    %621 = vector.load %arg5[%c0_257, %c0_258, %c144] : memref<2x1x768xf32, #tpu.memory_space<vmem>>, vector<1x1x512xf32>
    %622 = vector.shape_cast %621 : vector<1x1x512xf32> to vector<1x512xf32>
    %623 = vector.broadcast %619 : f32 to vector<1x512xf32>
    %624 = arith.mulf %622, %623 : vector<1x512xf32>
    %c1_259 = arith.constant 1 : index
    %c0_260 = arith.constant 0 : index
    %c144_261 = arith.constant 144 : index
    %625 = vector.load %arg5[%c1_259, %c0_260, %c144_261] : memref<2x1x768xf32, #tpu.memory_space<vmem>>, vector<1x1x512xf32>
    %626 = vector.shape_cast %625 : vector<1x1x512xf32> to vector<1x512xf32>
    %627 = vector.broadcast %620 : f32 to vector<1x512xf32>
    %628 = arith.mulf %626, %627 : vector<1x512xf32>
    %629 = arith.addf %624, %628 : vector<1x512xf32>
    %630 = arith.mulf %75, %147 : vector<1x512xf32>
    %631 = arith.mulf %629, %630 : vector<1x512xf32>
    %632 = arith.addf %618, %631 : vector<1x512xf32>
    %c32 = arith.constant 32 : index
    %633 = memref.load %arg3[%c32] : memref<98xf32, #tpu.memory_space<smem>>
    %c81_262 = arith.constant 81 : index
    %634 = memref.load %arg3[%c81_262] : memref<98xf32, #tpu.memory_space<smem>>
    %c0_263 = arith.constant 0 : index
    %c0_264 = arith.constant 0 : index
    %c145 = arith.constant 145 : index
    %635 = vector.load %arg5[%c0_263, %c0_264, %c145] : memref<2x1x768xf32, #tpu.memory_space<vmem>>, vector<1x1x512xf32>
    %636 = vector.shape_cast %635 : vector<1x1x512xf32> to vector<1x512xf32>
    %637 = vector.broadcast %633 : f32 to vector<1x512xf32>
    %638 = arith.mulf %636, %637 : vector<1x512xf32>
    %c1_265 = arith.constant 1 : index
    %c0_266 = arith.constant 0 : index
    %c145_267 = arith.constant 145 : index
    %639 = vector.load %arg5[%c1_265, %c0_266, %c145_267] : memref<2x1x768xf32, #tpu.memory_space<vmem>>, vector<1x1x512xf32>
    %640 = vector.shape_cast %639 : vector<1x1x512xf32> to vector<1x512xf32>
    %641 = vector.broadcast %634 : f32 to vector<1x512xf32>
    %642 = arith.mulf %640, %641 : vector<1x512xf32>
    %643 = arith.addf %638, %642 : vector<1x512xf32>
    %644 = arith.mulf %75, %159 : vector<1x512xf32>
    %645 = arith.mulf %643, %644 : vector<1x512xf32>
    %646 = arith.addf %632, %645 : vector<1x512xf32>
    %c33 = arith.constant 33 : index
    %647 = memref.load %arg3[%c33] : memref<98xf32, #tpu.memory_space<smem>>
    %c82_268 = arith.constant 82 : index
    %648 = memref.load %arg3[%c82_268] : memref<98xf32, #tpu.memory_space<smem>>
    %c0_269 = arith.constant 0 : index
    %c0_270 = arith.constant 0 : index
    %c146 = arith.constant 146 : index
    %649 = vector.load %arg5[%c0_269, %c0_270, %c146] : memref<2x1x768xf32, #tpu.memory_space<vmem>>, vector<1x1x512xf32>
    %650 = vector.shape_cast %649 : vector<1x1x512xf32> to vector<1x512xf32>
    %651 = vector.broadcast %647 : f32 to vector<1x512xf32>
    %652 = arith.mulf %650, %651 : vector<1x512xf32>
    %c1_271 = arith.constant 1 : index
    %c0_272 = arith.constant 0 : index
    %c146_273 = arith.constant 146 : index
    %653 = vector.load %arg5[%c1_271, %c0_272, %c146_273] : memref<2x1x768xf32, #tpu.memory_space<vmem>>, vector<1x1x512xf32>
    %654 = vector.shape_cast %653 : vector<1x1x512xf32> to vector<1x512xf32>
    %655 = vector.broadcast %648 : f32 to vector<1x512xf32>
    %656 = arith.mulf %654, %655 : vector<1x512xf32>
    %657 = arith.addf %652, %656 : vector<1x512xf32>
    %658 = arith.mulf %75, %171 : vector<1x512xf32>
    %659 = arith.mulf %657, %658 : vector<1x512xf32>
    %660 = arith.addf %646, %659 : vector<1x512xf32>
    %c34 = arith.constant 34 : index
    %661 = memref.load %arg3[%c34] : memref<98xf32, #tpu.memory_space<smem>>
    %c83_274 = arith.constant 83 : index
    %662 = memref.load %arg3[%c83_274] : memref<98xf32, #tpu.memory_space<smem>>
    %c0_275 = arith.constant 0 : index
    %c0_276 = arith.constant 0 : index
    %c147 = arith.constant 147 : index
    %663 = vector.load %arg5[%c0_275, %c0_276, %c147] : memref<2x1x768xf32, #tpu.memory_space<vmem>>, vector<1x1x512xf32>
    %664 = vector.shape_cast %663 : vector<1x1x512xf32> to vector<1x512xf32>
    %665 = vector.broadcast %661 : f32 to vector<1x512xf32>
    %666 = arith.mulf %664, %665 : vector<1x512xf32>
    %c1_277 = arith.constant 1 : index
    %c0_278 = arith.constant 0 : index
    %c147_279 = arith.constant 147 : index
    %667 = vector.load %arg5[%c1_277, %c0_278, %c147_279] : memref<2x1x768xf32, #tpu.memory_space<vmem>>, vector<1x1x512xf32>
    %668 = vector.shape_cast %667 : vector<1x1x512xf32> to vector<1x512xf32>
    %669 = vector.broadcast %662 : f32 to vector<1x512xf32>
    %670 = arith.mulf %668, %669 : vector<1x512xf32>
    %671 = arith.addf %666, %670 : vector<1x512xf32>
    %672 = arith.mulf %75, %183 : vector<1x512xf32>
    %673 = arith.mulf %671, %672 : vector<1x512xf32>
    %674 = arith.addf %660, %673 : vector<1x512xf32>
    %c35 = arith.constant 35 : index
    %675 = memref.load %arg3[%c35] : memref<98xf32, #tpu.memory_space<smem>>
    %c84 = arith.constant 84 : index
    %676 = memref.load %arg3[%c84] : memref<98xf32, #tpu.memory_space<smem>>
    %c0_280 = arith.constant 0 : index
    %c0_281 = arith.constant 0 : index
    %c157 = arith.constant 157 : index
    %677 = vector.load %arg5[%c0_280, %c0_281, %c157] : memref<2x1x768xf32, #tpu.memory_space<vmem>>, vector<1x1x512xf32>
    %678 = vector.shape_cast %677 : vector<1x1x512xf32> to vector<1x512xf32>
    %679 = vector.broadcast %675 : f32 to vector<1x512xf32>
    %680 = arith.mulf %678, %679 : vector<1x512xf32>
    %c1_282 = arith.constant 1 : index
    %c0_283 = arith.constant 0 : index
    %c157_284 = arith.constant 157 : index
    %681 = vector.load %arg5[%c1_282, %c0_283, %c157_284] : memref<2x1x768xf32, #tpu.memory_space<vmem>>, vector<1x1x512xf32>
    %682 = vector.shape_cast %681 : vector<1x1x512xf32> to vector<1x512xf32>
    %683 = vector.broadcast %676 : f32 to vector<1x512xf32>
    %684 = arith.mulf %682, %683 : vector<1x512xf32>
    %685 = arith.addf %680, %684 : vector<1x512xf32>
    %686 = arith.mulf %87, %111 : vector<1x512xf32>
    %687 = arith.mulf %685, %686 : vector<1x512xf32>
    %688 = arith.addf %674, %687 : vector<1x512xf32>
    %c36 = arith.constant 36 : index
    %689 = memref.load %arg3[%c36] : memref<98xf32, #tpu.memory_space<smem>>
    %c85 = arith.constant 85 : index
    %690 = memref.load %arg3[%c85] : memref<98xf32, #tpu.memory_space<smem>>
    %c0_285 = arith.constant 0 : index
    %c0_286 = arith.constant 0 : index
    %c158 = arith.constant 158 : index
    %691 = vector.load %arg5[%c0_285, %c0_286, %c158] : memref<2x1x768xf32, #tpu.memory_space<vmem>>, vector<1x1x512xf32>
    %692 = vector.shape_cast %691 : vector<1x1x512xf32> to vector<1x512xf32>
    %693 = vector.broadcast %689 : f32 to vector<1x512xf32>
    %694 = arith.mulf %692, %693 : vector<1x512xf32>
    %c1_287 = arith.constant 1 : index
    %c0_288 = arith.constant 0 : index
    %c158_289 = arith.constant 158 : index
    %695 = vector.load %arg5[%c1_287, %c0_288, %c158_289] : memref<2x1x768xf32, #tpu.memory_space<vmem>>, vector<1x1x512xf32>
    %696 = vector.shape_cast %695 : vector<1x1x512xf32> to vector<1x512xf32>
    %697 = vector.broadcast %690 : f32 to vector<1x512xf32>
    %698 = arith.mulf %696, %697 : vector<1x512xf32>
    %699 = arith.addf %694, %698 : vector<1x512xf32>
    %700 = arith.mulf %87, %123 : vector<1x512xf32>
    %701 = arith.mulf %699, %700 : vector<1x512xf32>
    %702 = arith.addf %688, %701 : vector<1x512xf32>
    %c37 = arith.constant 37 : index
    %703 = memref.load %arg3[%c37] : memref<98xf32, #tpu.memory_space<smem>>
    %c86 = arith.constant 86 : index
    %704 = memref.load %arg3[%c86] : memref<98xf32, #tpu.memory_space<smem>>
    %c0_290 = arith.constant 0 : index
    %c0_291 = arith.constant 0 : index
    %c159 = arith.constant 159 : index
    %705 = vector.load %arg5[%c0_290, %c0_291, %c159] : memref<2x1x768xf32, #tpu.memory_space<vmem>>, vector<1x1x512xf32>
    %706 = vector.shape_cast %705 : vector<1x1x512xf32> to vector<1x512xf32>
    %707 = vector.broadcast %703 : f32 to vector<1x512xf32>
    %708 = arith.mulf %706, %707 : vector<1x512xf32>
    %c1_292 = arith.constant 1 : index
    %c0_293 = arith.constant 0 : index
    %c159_294 = arith.constant 159 : index
    %709 = vector.load %arg5[%c1_292, %c0_293, %c159_294] : memref<2x1x768xf32, #tpu.memory_space<vmem>>, vector<1x1x512xf32>
    %710 = vector.shape_cast %709 : vector<1x1x512xf32> to vector<1x512xf32>
    %711 = vector.broadcast %704 : f32 to vector<1x512xf32>
    %712 = arith.mulf %710, %711 : vector<1x512xf32>
    %713 = arith.addf %708, %712 : vector<1x512xf32>
    %714 = arith.mulf %87, %135 : vector<1x512xf32>
    %715 = arith.mulf %713, %714 : vector<1x512xf32>
    %716 = arith.addf %702, %715 : vector<1x512xf32>
    %c38 = arith.constant 38 : index
    %717 = memref.load %arg3[%c38] : memref<98xf32, #tpu.memory_space<smem>>
    %c87 = arith.constant 87 : index
    %718 = memref.load %arg3[%c87] : memref<98xf32, #tpu.memory_space<smem>>
    %c0_295 = arith.constant 0 : index
    %c0_296 = arith.constant 0 : index
    %c160 = arith.constant 160 : index
    %719 = vector.load %arg5[%c0_295, %c0_296, %c160] : memref<2x1x768xf32, #tpu.memory_space<vmem>>, vector<1x1x512xf32>
    %720 = vector.shape_cast %719 : vector<1x1x512xf32> to vector<1x512xf32>
    %721 = vector.broadcast %717 : f32 to vector<1x512xf32>
    %722 = arith.mulf %720, %721 : vector<1x512xf32>
    %c1_297 = arith.constant 1 : index
    %c0_298 = arith.constant 0 : index
    %c160_299 = arith.constant 160 : index
    %723 = vector.load %arg5[%c1_297, %c0_298, %c160_299] : memref<2x1x768xf32, #tpu.memory_space<vmem>>, vector<1x1x512xf32>
    %724 = vector.shape_cast %723 : vector<1x1x512xf32> to vector<1x512xf32>
    %725 = vector.broadcast %718 : f32 to vector<1x512xf32>
    %726 = arith.mulf %724, %725 : vector<1x512xf32>
    %727 = arith.addf %722, %726 : vector<1x512xf32>
    %728 = arith.mulf %87, %147 : vector<1x512xf32>
    %729 = arith.mulf %727, %728 : vector<1x512xf32>
    %730 = arith.addf %716, %729 : vector<1x512xf32>
    %c39 = arith.constant 39 : index
    %731 = memref.load %arg3[%c39] : memref<98xf32, #tpu.memory_space<smem>>
    %c88 = arith.constant 88 : index
    %732 = memref.load %arg3[%c88] : memref<98xf32, #tpu.memory_space<smem>>
    %c0_300 = arith.constant 0 : index
    %c0_301 = arith.constant 0 : index
    %c161 = arith.constant 161 : index
    %733 = vector.load %arg5[%c0_300, %c0_301, %c161] : memref<2x1x768xf32, #tpu.memory_space<vmem>>, vector<1x1x512xf32>
    %734 = vector.shape_cast %733 : vector<1x1x512xf32> to vector<1x512xf32>
    %735 = vector.broadcast %731 : f32 to vector<1x512xf32>
    %736 = arith.mulf %734, %735 : vector<1x512xf32>
    %c1_302 = arith.constant 1 : index
    %c0_303 = arith.constant 0 : index
    %c161_304 = arith.constant 161 : index
    %737 = vector.load %arg5[%c1_302, %c0_303, %c161_304] : memref<2x1x768xf32, #tpu.memory_space<vmem>>, vector<1x1x512xf32>
    %738 = vector.shape_cast %737 : vector<1x1x512xf32> to vector<1x512xf32>
    %739 = vector.broadcast %732 : f32 to vector<1x512xf32>
    %740 = arith.mulf %738, %739 : vector<1x512xf32>
    %741 = arith.addf %736, %740 : vector<1x512xf32>
    %742 = arith.mulf %87, %159 : vector<1x512xf32>
    %743 = arith.mulf %741, %742 : vector<1x512xf32>
    %744 = arith.addf %730, %743 : vector<1x512xf32>
    %c40 = arith.constant 40 : index
    %745 = memref.load %arg3[%c40] : memref<98xf32, #tpu.memory_space<smem>>
    %c89 = arith.constant 89 : index
    %746 = memref.load %arg3[%c89] : memref<98xf32, #tpu.memory_space<smem>>
    %c0_305 = arith.constant 0 : index
    %c0_306 = arith.constant 0 : index
    %c162 = arith.constant 162 : index
    %747 = vector.load %arg5[%c0_305, %c0_306, %c162] : memref<2x1x768xf32, #tpu.memory_space<vmem>>, vector<1x1x512xf32>
    %748 = vector.shape_cast %747 : vector<1x1x512xf32> to vector<1x512xf32>
    %749 = vector.broadcast %745 : f32 to vector<1x512xf32>
    %750 = arith.mulf %748, %749 : vector<1x512xf32>
    %c1_307 = arith.constant 1 : index
    %c0_308 = arith.constant 0 : index
    %c162_309 = arith.constant 162 : index
    %751 = vector.load %arg5[%c1_307, %c0_308, %c162_309] : memref<2x1x768xf32, #tpu.memory_space<vmem>>, vector<1x1x512xf32>
    %752 = vector.shape_cast %751 : vector<1x1x512xf32> to vector<1x512xf32>
    %753 = vector.broadcast %746 : f32 to vector<1x512xf32>
    %754 = arith.mulf %752, %753 : vector<1x512xf32>
    %755 = arith.addf %750, %754 : vector<1x512xf32>
    %756 = arith.mulf %87, %171 : vector<1x512xf32>
    %757 = arith.mulf %755, %756 : vector<1x512xf32>
    %758 = arith.addf %744, %757 : vector<1x512xf32>
    %c41 = arith.constant 41 : index
    %759 = memref.load %arg3[%c41] : memref<98xf32, #tpu.memory_space<smem>>
    %c90 = arith.constant 90 : index
    %760 = memref.load %arg3[%c90] : memref<98xf32, #tpu.memory_space<smem>>
    %c0_310 = arith.constant 0 : index
    %c0_311 = arith.constant 0 : index
    %c163 = arith.constant 163 : index
    %761 = vector.load %arg5[%c0_310, %c0_311, %c163] : memref<2x1x768xf32, #tpu.memory_space<vmem>>, vector<1x1x512xf32>
    %762 = vector.shape_cast %761 : vector<1x1x512xf32> to vector<1x512xf32>
    %763 = vector.broadcast %759 : f32 to vector<1x512xf32>
    %764 = arith.mulf %762, %763 : vector<1x512xf32>
    %c1_312 = arith.constant 1 : index
    %c0_313 = arith.constant 0 : index
    %c163_314 = arith.constant 163 : index
    %765 = vector.load %arg5[%c1_312, %c0_313, %c163_314] : memref<2x1x768xf32, #tpu.memory_space<vmem>>, vector<1x1x512xf32>
    %766 = vector.shape_cast %765 : vector<1x1x512xf32> to vector<1x512xf32>
    %767 = vector.broadcast %760 : f32 to vector<1x512xf32>
    %768 = arith.mulf %766, %767 : vector<1x512xf32>
    %769 = arith.addf %764, %768 : vector<1x512xf32>
    %770 = arith.mulf %87, %183 : vector<1x512xf32>
    %771 = arith.mulf %769, %770 : vector<1x512xf32>
    %772 = arith.addf %758, %771 : vector<1x512xf32>
    %c42 = arith.constant 42 : index
    %773 = memref.load %arg3[%c42] : memref<98xf32, #tpu.memory_space<smem>>
    %c91 = arith.constant 91 : index
    %774 = memref.load %arg3[%c91] : memref<98xf32, #tpu.memory_space<smem>>
    %c0_315 = arith.constant 0 : index
    %c0_316 = arith.constant 0 : index
    %c173 = arith.constant 173 : index
    %775 = vector.load %arg5[%c0_315, %c0_316, %c173] : memref<2x1x768xf32, #tpu.memory_space<vmem>>, vector<1x1x512xf32>
    %776 = vector.shape_cast %775 : vector<1x1x512xf32> to vector<1x512xf32>
    %777 = vector.broadcast %773 : f32 to vector<1x512xf32>
    %778 = arith.mulf %776, %777 : vector<1x512xf32>
    %c1_317 = arith.constant 1 : index
    %c0_318 = arith.constant 0 : index
    %c173_319 = arith.constant 173 : index
    %779 = vector.load %arg5[%c1_317, %c0_318, %c173_319] : memref<2x1x768xf32, #tpu.memory_space<vmem>>, vector<1x1x512xf32>
    %780 = vector.shape_cast %779 : vector<1x1x512xf32> to vector<1x512xf32>
    %781 = vector.broadcast %774 : f32 to vector<1x512xf32>
    %782 = arith.mulf %780, %781 : vector<1x512xf32>
    %783 = arith.addf %778, %782 : vector<1x512xf32>
    %784 = arith.mulf %99, %111 : vector<1x512xf32>
    %785 = arith.mulf %783, %784 : vector<1x512xf32>
    %786 = arith.addf %772, %785 : vector<1x512xf32>
    %c43 = arith.constant 43 : index
    %787 = memref.load %arg3[%c43] : memref<98xf32, #tpu.memory_space<smem>>
    %c92 = arith.constant 92 : index
    %788 = memref.load %arg3[%c92] : memref<98xf32, #tpu.memory_space<smem>>
    %c0_320 = arith.constant 0 : index
    %c0_321 = arith.constant 0 : index
    %c174 = arith.constant 174 : index
    %789 = vector.load %arg5[%c0_320, %c0_321, %c174] : memref<2x1x768xf32, #tpu.memory_space<vmem>>, vector<1x1x512xf32>
    %790 = vector.shape_cast %789 : vector<1x1x512xf32> to vector<1x512xf32>
    %791 = vector.broadcast %787 : f32 to vector<1x512xf32>
    %792 = arith.mulf %790, %791 : vector<1x512xf32>
    %c1_322 = arith.constant 1 : index
    %c0_323 = arith.constant 0 : index
    %c174_324 = arith.constant 174 : index
    %793 = vector.load %arg5[%c1_322, %c0_323, %c174_324] : memref<2x1x768xf32, #tpu.memory_space<vmem>>, vector<1x1x512xf32>
    %794 = vector.shape_cast %793 : vector<1x1x512xf32> to vector<1x512xf32>
    %795 = vector.broadcast %788 : f32 to vector<1x512xf32>
    %796 = arith.mulf %794, %795 : vector<1x512xf32>
    %797 = arith.addf %792, %796 : vector<1x512xf32>
    %798 = arith.mulf %99, %123 : vector<1x512xf32>
    %799 = arith.mulf %797, %798 : vector<1x512xf32>
    %800 = arith.addf %786, %799 : vector<1x512xf32>
    %c44 = arith.constant 44 : index
    %801 = memref.load %arg3[%c44] : memref<98xf32, #tpu.memory_space<smem>>
    %c93_325 = arith.constant 93 : index
    %802 = memref.load %arg3[%c93_325] : memref<98xf32, #tpu.memory_space<smem>>
    %c0_326 = arith.constant 0 : index
    %c0_327 = arith.constant 0 : index
    %c175 = arith.constant 175 : index
    %803 = vector.load %arg5[%c0_326, %c0_327, %c175] : memref<2x1x768xf32, #tpu.memory_space<vmem>>, vector<1x1x512xf32>
    %804 = vector.shape_cast %803 : vector<1x1x512xf32> to vector<1x512xf32>
    %805 = vector.broadcast %801 : f32 to vector<1x512xf32>
    %806 = arith.mulf %804, %805 : vector<1x512xf32>
    %c1_328 = arith.constant 1 : index
    %c0_329 = arith.constant 0 : index
    %c175_330 = arith.constant 175 : index
    %807 = vector.load %arg5[%c1_328, %c0_329, %c175_330] : memref<2x1x768xf32, #tpu.memory_space<vmem>>, vector<1x1x512xf32>
    %808 = vector.shape_cast %807 : vector<1x1x512xf32> to vector<1x512xf32>
    %809 = vector.broadcast %802 : f32 to vector<1x512xf32>
    %810 = arith.mulf %808, %809 : vector<1x512xf32>
    %811 = arith.addf %806, %810 : vector<1x512xf32>
    %812 = arith.mulf %99, %135 : vector<1x512xf32>
    %813 = arith.mulf %811, %812 : vector<1x512xf32>
    %814 = arith.addf %800, %813 : vector<1x512xf32>
    %c45 = arith.constant 45 : index
    %815 = memref.load %arg3[%c45] : memref<98xf32, #tpu.memory_space<smem>>
    %c94_331 = arith.constant 94 : index
    %816 = memref.load %arg3[%c94_331] : memref<98xf32, #tpu.memory_space<smem>>
    %c0_332 = arith.constant 0 : index
    %c0_333 = arith.constant 0 : index
    %c176 = arith.constant 176 : index
    %817 = vector.load %arg5[%c0_332, %c0_333, %c176] : memref<2x1x768xf32, #tpu.memory_space<vmem>>, vector<1x1x512xf32>
    %818 = vector.shape_cast %817 : vector<1x1x512xf32> to vector<1x512xf32>
    %819 = vector.broadcast %815 : f32 to vector<1x512xf32>
    %820 = arith.mulf %818, %819 : vector<1x512xf32>
    %c1_334 = arith.constant 1 : index
    %c0_335 = arith.constant 0 : index
    %c176_336 = arith.constant 176 : index
    %821 = vector.load %arg5[%c1_334, %c0_335, %c176_336] : memref<2x1x768xf32, #tpu.memory_space<vmem>>, vector<1x1x512xf32>
    %822 = vector.shape_cast %821 : vector<1x1x512xf32> to vector<1x512xf32>
    %823 = vector.broadcast %816 : f32 to vector<1x512xf32>
    %824 = arith.mulf %822, %823 : vector<1x512xf32>
    %825 = arith.addf %820, %824 : vector<1x512xf32>
    %826 = arith.mulf %99, %147 : vector<1x512xf32>
    %827 = arith.mulf %825, %826 : vector<1x512xf32>
    %828 = arith.addf %814, %827 : vector<1x512xf32>
    %c46 = arith.constant 46 : index
    %829 = memref.load %arg3[%c46] : memref<98xf32, #tpu.memory_space<smem>>
    %c95_337 = arith.constant 95 : index
    %830 = memref.load %arg3[%c95_337] : memref<98xf32, #tpu.memory_space<smem>>
    %c0_338 = arith.constant 0 : index
    %c0_339 = arith.constant 0 : index
    %c177 = arith.constant 177 : index
    %831 = vector.load %arg5[%c0_338, %c0_339, %c177] : memref<2x1x768xf32, #tpu.memory_space<vmem>>, vector<1x1x512xf32>
    %832 = vector.shape_cast %831 : vector<1x1x512xf32> to vector<1x512xf32>
    %833 = vector.broadcast %829 : f32 to vector<1x512xf32>
    %834 = arith.mulf %832, %833 : vector<1x512xf32>
    %c1_340 = arith.constant 1 : index
    %c0_341 = arith.constant 0 : index
    %c177_342 = arith.constant 177 : index
    %835 = vector.load %arg5[%c1_340, %c0_341, %c177_342] : memref<2x1x768xf32, #tpu.memory_space<vmem>>, vector<1x1x512xf32>
    %836 = vector.shape_cast %835 : vector<1x1x512xf32> to vector<1x512xf32>
    %837 = vector.broadcast %830 : f32 to vector<1x512xf32>
    %838 = arith.mulf %836, %837 : vector<1x512xf32>
    %839 = arith.addf %834, %838 : vector<1x512xf32>
    %840 = arith.mulf %99, %159 : vector<1x512xf32>
    %841 = arith.mulf %839, %840 : vector<1x512xf32>
    %842 = arith.addf %828, %841 : vector<1x512xf32>
    %c47 = arith.constant 47 : index
    %843 = memref.load %arg3[%c47] : memref<98xf32, #tpu.memory_space<smem>>
    %c96_343 = arith.constant 96 : index
    %844 = memref.load %arg3[%c96_343] : memref<98xf32, #tpu.memory_space<smem>>
    %c0_344 = arith.constant 0 : index
    %c0_345 = arith.constant 0 : index
    %c178 = arith.constant 178 : index
    %845 = vector.load %arg5[%c0_344, %c0_345, %c178] : memref<2x1x768xf32, #tpu.memory_space<vmem>>, vector<1x1x512xf32>
    %846 = vector.shape_cast %845 : vector<1x1x512xf32> to vector<1x512xf32>
    %847 = vector.broadcast %843 : f32 to vector<1x512xf32>
    %848 = arith.mulf %846, %847 : vector<1x512xf32>
    %c1_346 = arith.constant 1 : index
    %c0_347 = arith.constant 0 : index
    %c178_348 = arith.constant 178 : index
    %849 = vector.load %arg5[%c1_346, %c0_347, %c178_348] : memref<2x1x768xf32, #tpu.memory_space<vmem>>, vector<1x1x512xf32>
    %850 = vector.shape_cast %849 : vector<1x1x512xf32> to vector<1x512xf32>
    %851 = vector.broadcast %844 : f32 to vector<1x512xf32>
    %852 = arith.mulf %850, %851 : vector<1x512xf32>
    %853 = arith.addf %848, %852 : vector<1x512xf32>
    %854 = arith.mulf %99, %171 : vector<1x512xf32>
    %855 = arith.mulf %853, %854 : vector<1x512xf32>
    %856 = arith.addf %842, %855 : vector<1x512xf32>
    %c48 = arith.constant 48 : index
    %857 = memref.load %arg3[%c48] : memref<98xf32, #tpu.memory_space<smem>>
    %c97_349 = arith.constant 97 : index
    %858 = memref.load %arg3[%c97_349] : memref<98xf32, #tpu.memory_space<smem>>
    %c0_350 = arith.constant 0 : index
    %c0_351 = arith.constant 0 : index
    %c179 = arith.constant 179 : index
    %859 = vector.load %arg5[%c0_350, %c0_351, %c179] : memref<2x1x768xf32, #tpu.memory_space<vmem>>, vector<1x1x512xf32>
    %860 = vector.shape_cast %859 : vector<1x1x512xf32> to vector<1x512xf32>
    %861 = vector.broadcast %857 : f32 to vector<1x512xf32>
    %862 = arith.mulf %860, %861 : vector<1x512xf32>
    %c1_352 = arith.constant 1 : index
    %c0_353 = arith.constant 0 : index
    %c179_354 = arith.constant 179 : index
    %863 = vector.load %arg5[%c1_352, %c0_353, %c179_354] : memref<2x1x768xf32, #tpu.memory_space<vmem>>, vector<1x1x512xf32>
    %864 = vector.shape_cast %863 : vector<1x1x512xf32> to vector<1x512xf32>
    %865 = vector.broadcast %858 : f32 to vector<1x512xf32>
    %866 = arith.mulf %864, %865 : vector<1x512xf32>
    %867 = arith.addf %862, %866 : vector<1x512xf32>
    %868 = arith.mulf %99, %183 : vector<1x512xf32>
    %869 = arith.mulf %867, %868 : vector<1x512xf32>
    %870 = arith.addf %856, %869 : vector<1x512xf32>
    %871 = arith.negf %870 : vector<1x512xf32>
    %872 = math.exp %871 : vector<1x512xf32>
    %cst_355 = arith.constant 1.000000e+00 : f32
    %873 = vector.broadcast %cst_355 : f32 to vector<1x512xf32>
    %874 = arith.addf %873, %872 : vector<1x512xf32>
    %875 = arith.divf %873, %874 : vector<1x512xf32>
    %876 = vector.shape_cast %875 : vector<1x512xf32> to vector<1x1x512xf32>
    %c0_356 = arith.constant 0 : index
    %c0_357 = arith.constant 0 : index
    %c0_358 = arith.constant 0 : index
    %877 = vector.load %arg1[%c0_356, %c0_357, %c0_358] : memref<1x4x512xf32, #tpu.memory_space<vmem>>, vector<1x4x512xf32>
    %878 = vector.broadcast %876 : vector<1x1x512xf32> to vector<1x4x512xf32>
    %879 = arith.mulf %877, %878 : vector<1x4x512xf32>
    %c0_359 = arith.constant 0 : index
    %c0_360 = arith.constant 0 : index
    %c0_361 = arith.constant 0 : index
    %880 = vector.load %arg4[%c0_359, %c0_360, %c0_361] : memref<1x4x512xf32, #tpu.memory_space<vmem>>, vector<1x4x512xf32>
    tpu.vector_store %arg4[%c0_359, %c0_360, %c0_361], %879 {strides = array<i32>} : memref<1x4x512xf32, #tpu.memory_space<vmem>>, vector<1x4x512xf32>,
    return
  }
  func.func @transform_0(%arg0: i32) -> (i32, i32, i32) {
    %c0_i32 = arith.constant 0 : i32
    %c0_i32_0 = arith.constant 0 : i32
    %c0_i32_1 = arith.constant 0 : i32
    return %arg0, %c0_i32, %c0_i32_0 : i32, i32, i32
  }
  func.func @transform_1(%arg0: i32) -> (i32, i32) {
    %c0_i32 = arith.constant 0 : i32
    %c0_i32_0 = arith.constant 0 : i32
    %c0_i32_1 = arith.constant 0 : i32
    return %c0_i32, %c0_i32_0 : i32, i32
  }
  func.func @transform_2(%arg0: i32) -> i32 {
    %c0_i32 = arith.constant 0 : i32
    %c0_i32_0 = arith.constant 0 : i32
    return %c0_i32 : i32
  }
  func.func @transform_3(%arg0: i32) -> (i32, i32, i32) {
    %c0_i32 = arith.constant 0 : i32
    %c0_i32_0 = arith.constant 0 : i32
    %c0_i32_1 = arith.constant 0 : i32
    return %arg0, %c0_i32, %c0_i32_0 : i32, i32, i32
  }
}

</mosaic_0001>

<llo_original>
// kernel: tpu_custom_call.1
$region0: #{tpu_custom_call.1}
  #allocation0 [shape = 'u32[]', space=smem, size = 0x4, offset = 0x4, fixed_abs, tag = 'smem constant byte address 0x4 - core index']
  #allocation1 [shape = 'u32[144,128]{1,0:T(1,128)}', space=vmem, size = 0x12000, scoped, tag = 'internal scratch']
  #allocation2 [shape = 'f32[2,1,768]{2,1,0:T(1,128)}', space=vmem, size = 0x1800, scoped, tag = 'scratch operand']
  %s0 = inlined_call_operand.hbm [shape: f32[1,4,512], index: 0, kind: input, shape index: {}]
  %s1 = inlined_call_operand.hbm [shape: s32[2,512], index: 1, kind: input, shape index: {}]
  %s2 = inlined_call_operand.vmem [shape: f32[98], index: 2, kind: input, shape index: {}]
  %s3 = inlined_call_operand.hbm [shape: f32[1,4,512], index: 3, kind: output, shape index: {}]
  %s4 = sld [smem:[#allocation0]]
  $region34: #{tpu_custom_call.1} parent=0
    _
  %s6 = ssub.s32 1, %s4
  %s7 = scalar_select 0, %s6, %s4
  $region1: #{tpu_custom_call.1} parent=0
    #allocation3 [shape = 'u8[8192]{0}', space=vmem, size = 0x2000, scoped, tag = 'input window, operand 0, single buffered']
    #allocation4 [shape = 's32[1]{0}', space=sflag, size = 0x4, scoped, tag = 'scoped memory for tpu_custom_call.1']
    #allocation5 [shape = 's32[1]{0}', space=sflag, size = 0x4, scoped, tag = 'scoped memory for tpu_custom_call.1']
    #allocation6 [shape = 's32[1]{0}', space=sflag, size = 0x4, scoped, tag = 'scoped memory for tpu_custom_call.1']
    #allocation7 [shape = 'u8[4096]{0}', space=vmem, size = 0x1000, scoped, tag = 'input window, operand 1, single buffered']
    #allocation8 [shape = 's32[1]{0}', space=sflag, size = 0x4, scoped, tag = 'scoped memory for tpu_custom_call.1']
    #allocation9 [shape = 'u8[512]{0}', space=smem, size = 0x200, scoped, tag = 'input window, operand 2, single buffered']
    #allocation10 [shape = 'u8[8192]{0}', space=vmem, size = 0x2000, scoped, tag = 'output window, operand 0, single buffered']
    %8 = vsyncpa [#allocation4], 0
    %9 = vsyncpa [#allocation8], 0
    %10 = vsyncpa [#allocation6], 0
    %11 = vsyncpa [#allocation5], 0
    // Predicated region
    $region2: #{tpu_custom_call.1} parent=1 // pred_check
      _
    $region3: #{tpu_custom_call.1} parent=1 // pred_check_branch
      %13 = sbr.rel (0) target = $region5
    $region4: #{tpu_custom_call.1} parent=1 // pred_region
      %s15 = ssub.s32 256, 256
      %16 = vsyncadd [#allocation4], %s15
      %s18 = sshll.u32 [#allocation3], 4
      %s19 = int_to_ptr.vmem [resolvable:$true] %s18
      %21 = dma.hbm_to_vmem [thread:$0]  %s0, 256, %s19, [#allocation4]
    $region5: #{tpu_custom_call.1} parent=1 // pred_fallthru
      _
    // Predicated region
    $region6: #{tpu_custom_call.1} parent=1 // pred_check
      _
    $region7: #{tpu_custom_call.1} parent=1 // pred_check_branch
      %23 = sbr.rel (0) target = $region9
    $region8: #{tpu_custom_call.1} parent=1 // pred_region
      %s25 = ssub.s32 128, 128
      %26 = vsyncadd [#allocation8], %s25
      %s28 = sshll.u32 [#allocation7], 4
      %s29 = int_to_ptr.vmem [resolvable:$true] %s28
      %31 = dma.hbm_to_vmem [thread:$0]  %s1, 128, %s29, [#allocation8]
    $region9: #{tpu_custom_call.1} parent=1 // pred_fallthru
      _
    // Predicated region
    $region10: #{tpu_custom_call.1} parent=1 // pred_check
      _
    $region11: #{tpu_custom_call.1} parent=1 // pred_check_branch
      %33 = sbr.rel (0) target = $region13
    $region12: #{tpu_custom_call.1} parent=1 // pred_region
      %s35 = ssub.s32 16, 16
      %36 = vsyncadd [#allocation6], %s35
      %s38 = sshll.u32 %s2, 4
      %s39 = int_to_ptr.vmem [resolvable:$true] %s38
      %41 = dma.vmem_to_smem %s39, 16, [#allocation9], [#allocation6]
    $region13: #{tpu_custom_call.1} parent=1 // pred_fallthru
      _
    // Predicated region
    $region14: #{tpu_custom_call.1} parent=1 // pred_check
      _
    $region15: #{tpu_custom_call.1} parent=1 // pred_check_branch
      %43 = sbr.rel (0) target = $region17
    $region16: #{tpu_custom_call.1} parent=1 // pred_region
      %44 = dma.done [#allocation4], 256
    $region17: #{tpu_custom_call.1} parent=1 // pred_fallthru
      _
    // Predicated region
    $region18: #{tpu_custom_call.1} parent=1 // pred_check
      _
    $region19: #{tpu_custom_call.1} parent=1 // pred_check_branch
      %46 = sbr.rel (0) target = $region21
    $region20: #{tpu_custom_call.1} parent=1 // pred_region
      %47 = dma.done [#allocation8], 128
    $region21: #{tpu_custom_call.1} parent=1 // pred_fallthru
      _
    // Predicated region
    $region22: #{tpu_custom_call.1} parent=1 // pred_check
      _
    $region23: #{tpu_custom_call.1} parent=1 // pred_check_branch
      %49 = sbr.rel (0) target = $region25
    $region24: #{tpu_custom_call.1} parent=1 // pred_region
      %50 = dma.done [#allocation6], 16
    $region25: #{tpu_custom_call.1} parent=1 // pred_fallthru
      _
    %51 = sfence
    %v52 = vld [vmem:[#allocation3] sm:$0xff]
    %v53 = vld [vmem:[#allocation3 + $0x8] sm:$0xff]
    %v56 = vcombine.high %v52, %v52
    %v57 = vcombine.high %v53, %v53
    %vm60 = vcmask 1043456
    %v61 = vsel %vm60, %v52, 0.0
    %v62 = vrot.slane %v61, 4
    %v63 = vadd.f32 %v61, %v62
    %v64 = vrot.slane %v63, 2
    %v65 = vadd.f32 %v63, %v64
    %v66 = vrot.slane %v65, 1
    %v67 = vadd.f32 %v65, %v66
    %v68 = vsel %vm60, %v56, 0.0
    %v69 = vrot.slane %v68, 4
    %v70 = vadd.f32 %v68, %v69
    %v71 = vrot.slane %v70, 2
    %v72 = vadd.f32 %v70, %v71
    %v73 = vrot.slane %v72, 1
    %v74 = vadd.f32 %v72, %v73
    %v75 = vsel %vm60, %v53, 0.0
    %v76 = vrot.slane %v75, 4
    %v77 = vadd.f32 %v75, %v76
    %v78 = vrot.slane %v77, 2
    %v79 = vadd.f32 %v77, %v78
    %v80 = vrot.slane %v79, 1
    %v81 = vadd.f32 %v79, %v80
    %v82 = vsel %vm60, %v57, 0.0
    %v83 = vrot.slane %v82, 4
    %v84 = vadd.f32 %v82, %v83
    %v85 = vrot.slane %v84, 2
    %v86 = vadd.f32 %v84, %v85
    %v87 = vrot.slane %v86, 1
    %v88 = vadd.f32 %v86, %v87
    %v89 = vsel %vm60, %v52, -inf
    %v90 = vrot.slane %v89, 4
    %v91 = vmax.f32 %v89, %v90
    %v92 = vrot.slane %v91, 2
    %v93 = vmax.f32 %v91, %v92
    %v94 = vrot.slane %v93, 1
    %v95 = vmax.f32 %v93, %v94
    %v96 = vsel %vm60, %v56, -inf
    %v97 = vrot.slane %v96, 4
    %v98 = vmax.f32 %v96, %v97
    %v99 = vrot.slane %v98, 2
    %v100 = vmax.f32 %v98, %v99
    %v101 = vrot.slane %v100, 1
    %v102 = vmax.f32 %v100, %v101
    %v103 = vsel %vm60, %v53, -inf
    %v104 = vrot.slane %v103, 4
    %v105 = vmax.f32 %v103, %v104
    %v106 = vrot.slane %v105, 2
    %v107 = vmax.f32 %v105, %v106
    %v108 = vrot.slane %v107, 1
    %v109 = vmax.f32 %v107, %v108
    %v110 = vsel %vm60, %v57, -inf
    %v111 = vrot.slane %v110, 4
    %v112 = vmax.f32 %v110, %v111
    %v113 = vrot.slane %v112, 2
    %v114 = vmax.f32 %v112, %v113
    %v115 = vrot.slane %v114, 1
    %v116 = vmax.f32 %v114, %v115
    %v117 = vlaneseq
    %vm118 = vcmp.ge.s32.totalorder %v117, 0
    %vm119 = vcmp.lt.s32.totalorder %v117, 128
    %vm120 = vmand %vm118, %vm119
    %121 = vst.msk [vmem:[#allocation2] sm:$0x1] %vm120, 0.0
    %122 = vst.msk [vmem:[#allocation2 + $0x6] sm:$0x1] %vm120, 0.0
    %123 = vst.msk [vmem:[#allocation2 + $0x5] sm:$0x1] %vm120, 0.0
    %124 = vst.msk [vmem:[#allocation2 + $0xb] sm:$0x1] %vm120, 0.0
    %v125 = vmul.f32 %v67, 0.25
    %v126 = vmul.f32 %v74, 0.25
    %v127 = vmul.f32 %v81, 0.25
    %v128 = vmul.f32 %v88, 0.25
    %v133 = vcombine.low %v125, %v126
    %v134 = vcombine.low %v127, %v128
    %v136 = vunpack.c.l.s4 1966171168
    %v137 = vunpack.c.0.s8 %v136
    %v138 = vlaneseq
    %v139 = vshrl.u32 %v138, 7
    %v140 = vsub.s32 %v137, %v139
    %v141 = vrot.slane %v133, %v140
    %v143 = vunpack.c.l.s4 1966171168
    %v144 = vunpack.c.0.s8 %v143
    %v145 = vlaneseq
    %v146 = vshrl.u32 %v145, 7
    %v147 = vsub.s32 %v144, %v146
    %v148 = vrot.slane %v134, %v147
    %v149 = vcombine.low %v141, %v148
    %v151 = vunpack.c.l.s4 1966171168
    %v152 = vunpack.c.0.s8 %v151
    %v153 = vlaneseq
    %v154 = vshrl.u32 %v153, 7
    %v155 = vsub.s32 %v152, %v154
    %v156 = vrot.slane %v149, %v155
    %vm158 = vcmp.lt.s32.totalorder %v117, 512
    %vm159 = vmand %vm118, %vm158
    %160 = vst.msk [vmem:[#allocation2 + $0x1] sm:$0xf] %vm159, %v156
    %v165 = vcombine.low %v95, %v102
    %v166 = vcombine.low %v109, %v116
    %v168 = vunpack.c.l.s4 1966171168
    %v169 = vunpack.c.0.s8 %v168
    %v170 = vlaneseq
    %v171 = vshrl.u32 %v170, 7
    %v172 = vsub.s32 %v169, %v171
    %v173 = vrot.slane %v165, %v172
    %v175 = vunpack.c.l.s4 1966171168
    %v176 = vunpack.c.0.s8 %v175
    %v177 = vlaneseq
    %v178 = vshrl.u32 %v177, 7
    %v179 = vsub.s32 %v176, %v178
    %v180 = vrot.slane %v166, %v179
    %v181 = vcombine.low %v173, %v180
    %v183 = vunpack.c.l.s4 1966171168
    %v184 = vunpack.c.0.s8 %v183
    %v185 = vlaneseq
    %v186 = vshrl.u32 %v185, 7
    %v187 = vsub.s32 %v184, %v186
    %v188 = vrot.slane %v181, %v187
    %s190 = scalar_lea.vmem [#allocation2], 6
    %191 = vst.msk [vmem:[%s190 + $0x1] sm:$0xf] %vm159, %v188
    %v192 = vld [vmem:[#allocation7] ss:$2 sm:$0xf]
    %s193 = scalar_lea.vmem [#allocation7], 1
    %v194 = vld [vmem:[%s193] ss:$2 sm:$0xf]
    %v195 = vadd.s32 %v192, 4294967293
    %vm196 = vcmp.ge.s32.totalorder %v195, 0
    %vm197 = vcmp.lt.s32.totalorder %v195, 16
    %vm198 = vmand %vm196, %vm197
    %v199 = vsel %vm198, 1.0, 0.0
    %v200 = vadd.s32 %v192, 4294967294
    %vm201 = vcmp.ge.s32.totalorder %v200, 0
    %vm202 = vcmp.lt.s32.totalorder %v200, 16
    %vm203 = vmand %vm201, %vm202
    %v204 = vsel %vm203, 1.0, 0.0
    %v205 = vadd.s32 %v192, 4294967295
    %vm206 = vcmp.ge.s32.totalorder %v205, 0
    %vm207 = vcmp.lt.s32.totalorder %v205, 16
    %vm208 = vmand %vm206, %vm207
    %v209 = vsel %vm208, 1.0, 0.0
    %vm210 = vcmp.ge.s32.totalorder %v192, 0
    %vm211 = vcmp.lt.s32.totalorder %v192, 16
    %vm212 = vmand %vm210, %vm211
    %v213 = vsel %vm212, 1.0, 0.0
    %v214 = vadd.s32 %v192, 1
    %vm215 = vcmp.ge.s32.totalorder %v214, 0
    %vm216 = vcmp.lt.s32.totalorder %v214, 16
    %vm217 = vmand %vm215, %vm216
    %v218 = vsel %vm217, 1.0, 0.0
    %v219 = vadd.s32 %v192, 2
    %vm220 = vcmp.ge.s32.totalorder %v219, 0
    %vm221 = vcmp.lt.s32.totalorder %v219, 16
    %vm222 = vmand %vm220, %vm221
    %v223 = vsel %vm222, 1.0, 0.0
    %v224 = vadd.s32 %v192, 3
    %vm225 = vcmp.ge.s32.totalorder %v224, 0
    %vm226 = vcmp.lt.s32.totalorder %v224, 16
    %vm227 = vmand %vm225, %vm226
    %v228 = vsel %vm227, 1.0, 0.0
    %v229 = vadd.s32 %v194, 4294967293
    %vm230 = vcmp.ge.s32.totalorder %v229, 0
    %vm231 = vcmp.lt.s32.totalorder %v229, 16
    %vm232 = vmand %vm230, %vm231
    %v233 = vsel %vm232, 1.0, 0.0
    %v234 = vadd.s32 %v194, 4294967294
    %vm235 = vcmp.ge.s32.totalorder %v234, 0
    %vm236 = vcmp.lt.s32.totalorder %v234, 16
    %vm237 = vmand %vm235, %vm236
    %v238 = vsel %vm237, 1.0, 0.0
    %v239 = vadd.s32 %v194, 4294967295
    %vm240 = vcmp.ge.s32.totalorder %v239, 0
    %vm241 = vcmp.lt.s32.totalorder %v239, 16
    %vm242 = vmand %vm240, %vm241
    %v243 = vsel %vm242, 1.0, 0.0
    %vm244 = vcmp.ge.s32.totalorder %v194, 0
    %vm245 = vcmp.lt.s32.totalorder %v194, 16
    %vm246 = vmand %vm244, %vm245
    %v247 = vsel %vm246, 1.0, 0.0
    %v248 = vadd.s32 %v194, 1
    %vm249 = vcmp.ge.s32.totalorder %v248, 0
    %vm250 = vcmp.lt.s32.totalorder %v248, 16
    %vm251 = vmand %vm249, %vm250
    %v252 = vsel %vm251, 1.0, 0.0
    %v253 = vadd.s32 %v194, 2
    %vm254 = vcmp.ge.s32.totalorder %v253, 0
    %vm255 = vcmp.lt.s32.totalorder %v253, 16
    %vm256 = vmand %vm254, %vm255
    %v257 = vsel %vm256, 1.0, 0.0
    %v258 = vadd.s32 %v194, 3
    %vm259 = vcmp.ge.s32.totalorder %v258, 0
    %vm260 = vcmp.lt.s32.totalorder %v258, 16
    %vm261 = vmand %vm259, %vm260
    %v262 = vsel %vm261, 1.0, 0.0
    %s263 = sld [smem:[#allocation9]]
    %s264 = sld [smem:[#allocation9 + $0x31]]
    %v265 = vld [vmem:[#allocation2] sm:$0x1f]
    %v266 = vstv %s263
    %v267 = vmul.f32 %v265, %v266
    %v268 = vld [vmem:[%s190] sm:$0x1f]
    %v269 = vstv %s264
    %v270 = vmul.f32 %v268, %v269
    %v271 = vadd.f32 %v267, %v270
    %v272 = vmul.f32 %v199, %v233
    %274 = vrot.lane.b32.xlu0 %v272, 77
    %v275 = vpop.permute.xlu0 %274
    %v276 = vrot.slane %v275, 7
    %vm277 = vcmask 629760
    %v278 = vsel %vm277, %v276, %v275
    %v280 = vmul.f32 %v271, %v278
    %v281 = vadd.f32 %v280, 0.0
    %s282 = sld [smem:[#allocation9 + $0x1]]
    %s283 = sld [smem:[#allocation9 + $0x32]]
    %v284 = vstv %s282
    %v285 = vmul.f32 %v265, %v284
    %v286 = vstv %s283
    %v287 = vmul.f32 %v268, %v286
    %v288 = vadd.f32 %v285, %v287
    %v289 = vmul.f32 %v199, %v238
    %291 = vrot.lane.b32.xlu0 %v289, 78
    %v292 = vpop.permute.xlu0 %291
    %v293 = vrot.slane %v292, 7
    %vm294 = vcmask 637952
    %v295 = vsel %vm294, %v293, %v292
    %v297 = vmul.f32 %v288, %v295
    %299 = vrot.lane.b32.xlu0 %v297, 127
    %v300 = vpop.permute.xlu0 %299
    %v301 = vrot.slane %v300, 1
    %vm302 = vcmask 1039360
    %v303 = vsel %vm302, %v300, %v301
    %v305 = vadd.f32 %v281, %v303
    %s306 = sld [smem:[#allocation9 + $0x2]]
    %s307 = sld [smem:[#allocation9 + $0x33]]
    %v308 = vstv %s306
    %v309 = vmul.f32 %v265, %v308
    %v310 = vstv %s307
    %v311 = vmul.f32 %v268, %v310
    %v312 = vadd.f32 %v309, %v311
    %v313 = vmul.f32 %v199, %v243
    %315 = vrot.lane.b32.xlu0 %v313, 79
    %v316 = vpop.permute.xlu0 %315
    %v317 = vrot.slane %v316, 7
    %vm318 = vcmask 646144
    %v319 = vsel %vm318, %v317, %v316
    %v321 = vmul.f32 %v312, %v319
    %323 = vrot.lane.b32.xlu0 %v321, 126
    %v324 = vpop.permute.xlu0 %323
    %v325 = vrot.slane %v324, 1
    %vm326 = vcmask 1031168
    %v327 = vsel %vm326, %v324, %v325
    %v329 = vadd.f32 %v305, %v327
    %s330 = sld [smem:[#allocation9 + $0x3]]
    %s331 = sld [smem:[#allocation9 + $0x34]]
    %v332 = vstv %s330
    %v333 = vmul.f32 %v265, %v332
    %v334 = vstv %s331
    %v335 = vmul.f32 %v268, %v334
    %v336 = vadd.f32 %v333, %v335
    %v337 = vmul.f32 %v199, %v247
    %339 = vrot.lane.b32.xlu0 %v337, 80
    %v340 = vpop.permute.xlu0 %339
    %v341 = vrot.slane %v340, 7
    %vm342 = vcmask 654336
    %v343 = vsel %vm342, %v341, %v340
    %v345 = vmul.f32 %v336, %v343
    %347 = vrot.lane.b32.xlu0 %v345, 125
    %v348 = vpop.permute.xlu0 %347
    %v349 = vrot.slane %v348, 1
    %vm350 = vcmask 1022976
    %v351 = vsel %vm350, %v348, %v349
    %v353 = vadd.f32 %v329, %v351
    %s354 = sld [smem:[#allocation9 + $0x4]]
    %s355 = sld [smem:[#allocation9 + $0x35]]
    %v356 = vstv %s354
    %v357 = vmul.f32 %v265, %v356
    %v358 = vstv %s355
    %v359 = vmul.f32 %v268, %v358
    %v360 = vadd.f32 %v357, %v359
    %v361 = vmul.f32 %v199, %v252
    %363 = vrot.lane.b32.xlu0 %v361, 81
    %v364 = vpop.permute.xlu0 %363
    %v365 = vrot.slane %v364, 7
    %vm366 = vcmask 662528
    %v367 = vsel %vm366, %v365, %v364
    %v369 = vmul.f32 %v360, %v367
    %371 = vrot.lane.b32.xlu0 %v369, 124
    %v372 = vpop.permute.xlu0 %371
    %v373 = vrot.slane %v372, 1
    %vm374 = vcmask 1014784
    %v375 = vsel %vm374, %v372, %v373
    %v377 = vadd.f32 %v353, %v375
    %s378 = sld [smem:[#allocation9 + $0x5]]
    %s379 = sld [smem:[#allocation9 + $0x36]]
    %v380 = vstv %s378
    %v381 = vmul.f32 %v265, %v380
    %v382 = vstv %s379
    %v383 = vmul.f32 %v268, %v382
    %v384 = vadd.f32 %v381, %v383
    %v385 = vmul.f32 %v199, %v257
    %387 = vrot.lane.b32.xlu0 %v385, 82
    %v388 = vpop.permute.xlu0 %387
    %v389 = vrot.slane %v388, 7
    %vm390 = vcmask 670720
    %v391 = vsel %vm390, %v389, %v388
    %v393 = vmul.f32 %v384, %v391
    %395 = vrot.lane.b32.xlu0 %v393, 123
    %v396 = vpop.permute.xlu0 %395
    %v397 = vrot.slane %v396, 1
    %vm398 = vcmask 1006592
    %v399 = vsel %vm398, %v396, %v397
    %v401 = vadd.f32 %v377, %v399
    %s402 = sld [smem:[#allocation9 + $0x6]]
    %s403 = sld [smem:[#allocation9 + $0x37]]
    %v404 = vstv %s402
    %v405 = vmul.f32 %v265, %v404
    %v406 = vstv %s403
    %v407 = vmul.f32 %v268, %v406
    %v408 = vadd.f32 %v405, %v407
    %v409 = vmul.f32 %v199, %v262
    %411 = vrot.lane.b32.xlu0 %v409, 83
    %v412 = vpop.permute.xlu0 %411
    %v413 = vrot.slane %v412, 7
    %vm414 = vcmask 678912
    %v415 = vsel %vm414, %v413, %v412
    %v417 = vmul.f32 %v408, %v415
    %419 = vrot.lane.b32.xlu0 %v417, 122
    %v420 = vpop.permute.xlu0 %419
    %v421 = vrot.slane %v420, 1
    %vm422 = vcmask 998400
    %v423 = vsel %vm422, %v420, %v421
    %v425 = vadd.f32 %v401, %v423
    %s426 = sld [smem:[#allocation9 + $0x7]]
    %s427 = sld [smem:[#allocation9 + $0x38]]
    %v428 = vstv %s426
    %v429 = vmul.f32 %v265, %v428
    %v430 = vstv %s427
    %v431 = vmul.f32 %v268, %v430
    %v432 = vadd.f32 %v429, %v431
    %v433 = vmul.f32 %v204, %v233
    %435 = vrot.lane.b32.xlu0 %v433, 93
    %v436 = vpop.permute.xlu0 %435
    %v437 = vrot.slane %v436, 7
    %vm438 = vcmask 760832
    %v439 = vsel %vm438, %v437, %v436
    %v441 = vmul.f32 %v432, %v439
    %443 = vrot.lane.b32.xlu0 %v441, 112
    %v444 = vpop.permute.xlu0 %443
    %v445 = vrot.slane %v444, 1
    %vm446 = vcmask 916480
    %v447 = vsel %vm446, %v444, %v445
    %v449 = vadd.f32 %v425, %v447
    %s450 = sld [smem:[#allocation9 + $0x8]]
    %s451 = sld [smem:[#allocation9 + $0x39]]
    %v452 = vstv %s450
    %v453 = vmul.f32 %v265, %v452
    %v454 = vstv %s451
    %v455 = vmul.f32 %v268, %v454
    %v456 = vadd.f32 %v453, %v455
    %v457 = vmul.f32 %v204, %v238
    %459 = vrot.lane.b32.xlu0 %v457, 94
    %v460 = vpop.permute.xlu0 %459
    %v461 = vrot.slane %v460, 7
    %vm462 = vcmask 769024
    %v463 = vsel %vm462, %v461, %v460
    %v465 = vmul.f32 %v456, %v463
    %467 = vrot.lane.b32.xlu0 %v465, 111
    %v468 = vpop.permute.xlu0 %467
    %v469 = vrot.slane %v468, 1
    %vm470 = vcmask 908288
    %v471 = vsel %vm470, %v468, %v469
    %v473 = vadd.f32 %v449, %v471
    %s474 = sld [smem:[#allocation9 + $0x9]]
    %s475 = sld [smem:[#allocation9 + $0x3a]]
    %v476 = vstv %s474
    %v477 = vmul.f32 %v265, %v476
    %v478 = vstv %s475
    %v479 = vmul.f32 %v268, %v478
    %v480 = vadd.f32 %v477, %v479
    %v481 = vmul.f32 %v204, %v243
    %483 = vrot.lane.b32.xlu0 %v481, 95
    %v484 = vpop.permute.xlu0 %483
    %v485 = vrot.slane %v484, 7
    %vm486 = vcmask 777216
    %v487 = vsel %vm486, %v485, %v484
    %v489 = vmul.f32 %v480, %v487
    %491 = vrot.lane.b32.xlu0 %v489, 110
    %v492 = vpop.permute.xlu0 %491
    %v493 = vrot.slane %v492, 1
    %vm494 = vcmask 900096
    %v495 = vsel %vm494, %v492, %v493
    %v497 = vadd.f32 %v473, %v495
    %s498 = sld [smem:[#allocation9 + $0xa]]
    %s499 = sld [smem:[#allocation9 + $0x3b]]
    %v500 = vstv %s498
    %v501 = vmul.f32 %v265, %v500
    %v502 = vstv %s499
    %v503 = vmul.f32 %v268, %v502
    %v504 = vadd.f32 %v501, %v503
    %v505 = vmul.f32 %v204, %v247
    %507 = vrot.lane.b32.xlu0 %v505, 96
    %v508 = vpop.permute.xlu0 %507
    %v509 = vrot.slane %v508, 7
    %vm510 = vcmask 785408
    %v511 = vsel %vm510, %v509, %v508
    %v513 = vmul.f32 %v504, %v511
    %515 = vrot.lane.b32.xlu0 %v513, 109
    %v516 = vpop.permute.xlu0 %515
    %v517 = vrot.slane %v516, 1
    %vm518 = vcmask 891904
    %v519 = vsel %vm518, %v516, %v517
    %v521 = vadd.f32 %v497, %v519
    %s522 = sld [smem:[#allocation9 + $0xb]]
    %s523 = sld [smem:[#allocation9 + $0x3c]]
    %v524 = vstv %s522
    %v525 = vmul.f32 %v265, %v524
    %v526 = vstv %s523
    %v527 = vmul.f32 %v268, %v526
    %v528 = vadd.f32 %v525, %v527
    %v529 = vmul.f32 %v204, %v252
    %531 = vrot.lane.b32.xlu0 %v529, 97
    %v532 = vpop.permute.xlu0 %531
    %v533 = vrot.slane %v532, 7
    %vm534 = vcmask 793600
    %v535 = vsel %vm534, %v533, %v532
    %v537 = vmul.f32 %v528, %v535
    %539 = vrot.lane.b32.xlu0 %v537, 108
    %v540 = vpop.permute.xlu0 %539
    %v541 = vrot.slane %v540, 1
    %vm542 = vcmask 883712
    %v543 = vsel %vm542, %v540, %v541
    %v545 = vadd.f32 %v521, %v543
    %s546 = sld [smem:[#allocation9 + $0xc]]
    %s547 = sld [smem:[#allocation9 + $0x3d]]
    %v548 = vstv %s546
    %v549 = vmul.f32 %v265, %v548
    %v550 = vstv %s547
    %v551 = vmul.f32 %v268, %v550
    %v552 = vadd.f32 %v549, %v551
    %v553 = vmul.f32 %v204, %v257
    %555 = vrot.lane.b32.xlu0 %v553, 98
    %v556 = vpop.permute.xlu0 %555
    %v557 = vrot.slane %v556, 7
    %vm558 = vcmask 801792
    %v559 = vsel %vm558, %v557, %v556
    %v561 = vmul.f32 %v552, %v559
    %563 = vrot.lane.b32.xlu0 %v561, 107
    %v564 = vpop.permute.xlu0 %563
    %v565 = vrot.slane %v564, 1
    %vm566 = vcmask 875520
    %v567 = vsel %vm566, %v564, %v565
    %v569 = vadd.f32 %v545, %v567
    %s570 = sld [smem:[#allocation9 + $0xd]]
    %s571 = sld [smem:[#allocation9 + $0x3e]]
    %v572 = vstv %s570
    %v573 = vmul.f32 %v265, %v572
    %v574 = vstv %s571
    %v575 = vmul.f32 %v268, %v574
    %v576 = vadd.f32 %v573, %v575
    %v577 = vmul.f32 %v204, %v262
    %579 = vrot.lane.b32.xlu0 %v577, 99
    %v580 = vpop.permute.xlu0 %579
    %v581 = vrot.slane %v580, 7
    %vm582 = vcmask 809984
    %v583 = vsel %vm582, %v581, %v580
    %v585 = vmul.f32 %v576, %v583
    %587 = vrot.lane.b32.xlu0 %v585, 106
    %v588 = vpop.permute.xlu0 %587
    %v589 = vrot.slane %v588, 1
    %vm590 = vcmask 867328
    %v591 = vsel %vm590, %v588, %v589
    %v593 = vadd.f32 %v569, %v591
    %s594 = sld [smem:[#allocation9 + $0xe]]
    %s595 = sld [smem:[#allocation9 + $0x3f]]
    %v596 = vstv %s594
    %v597 = vmul.f32 %v265, %v596
    %v598 = vstv %s595
    %v599 = vmul.f32 %v268, %v598
    %v600 = vadd.f32 %v597, %v599
    %v601 = vmul.f32 %v209, %v233
    %603 = vrot.lane.b32.xlu0 %v601, 109
    %v604 = vpop.permute.xlu0 %603
    %v605 = vrot.slane %v604, 7
    %v606 = vsel %vm518, %v605, %v604
    %v608 = vmul.f32 %v600, %v606
    %610 = vrot.lane.b32.xlu0 %v608, 96
    %v611 = vpop.permute.xlu0 %610
    %v612 = vrot.slane %v611, 1
    %v613 = vsel %vm510, %v611, %v612
    %v615 = vadd.f32 %v593, %v613
    %s616 = sld [smem:[#allocation9 + $0xf]]
    %s617 = sld [smem:[#allocation9 + $0x40]]
    %v618 = vstv %s616
    %v619 = vmul.f32 %v265, %v618
    %v620 = vstv %s617
    %v621 = vmul.f32 %v268, %v620
    %v622 = vadd.f32 %v619, %v621
    %v623 = vmul.f32 %v209, %v238
    %625 = vrot.lane.b32.xlu0 %v623, 110
    %v626 = vpop.permute.xlu0 %625
    %v627 = vrot.slane %v626, 7
    %v628 = vsel %vm494, %v627, %v626
    %v630 = vmul.f32 %v622, %v628
    %632 = vrot.lane.b32.xlu0 %v630, 95
    %v633 = vpop.permute.xlu0 %632
    %v634 = vrot.slane %v633, 1
    %v635 = vsel %vm486, %v633, %v634
    %v637 = vadd.f32 %v615, %v635
    %s638 = sld [smem:[#allocation9 + $0x10]]
    %s639 = sld [smem:[#allocation9 + $0x41]]
    %v640 = vstv %s638
    %v641 = vmul.f32 %v265, %v640
    %v642 = vstv %s639
    %v643 = vmul.f32 %v268, %v642
    %v644 = vadd.f32 %v641, %v643
    %v645 = vmul.f32 %v209, %v243
    %647 = vrot.lane.b32.xlu0 %v645, 111
    %v648 = vpop.permute.xlu0 %647
    %v649 = vrot.slane %v648, 7
    %v650 = vsel %vm470, %v649, %v648
    %v652 = vmul.f32 %v644, %v650
    %654 = vrot.lane.b32.xlu0 %v652, 94
    %v655 = vpop.permute.xlu0 %654
    %v656 = vrot.slane %v655, 1
    %v657 = vsel %vm462, %v655, %v656
    %v659 = vadd.f32 %v637, %v657
    %s660 = sld [smem:[#allocation9 + $0x11]]
    %s661 = sld [smem:[#allocation9 + $0x42]]
    %v662 = vstv %s660
    %v663 = vmul.f32 %v265, %v662
    %v664 = vstv %s661
    %v665 = vmul.f32 %v268, %v664
    %v666 = vadd.f32 %v663, %v665
    %v667 = vmul.f32 %v209, %v247
    %669 = vrot.lane.b32.xlu0 %v667, 112
    %v670 = vpop.permute.xlu0 %669
    %v671 = vrot.slane %v670, 7
    %v672 = vsel %vm446, %v671, %v670
    %v674 = vmul.f32 %v666, %v672
    %676 = vrot.lane.b32.xlu0 %v674, 93
    %v677 = vpop.permute.xlu0 %676
    %v678 = vrot.slane %v677, 1
    %v679 = vsel %vm438, %v677, %v678
    %v681 = vadd.f32 %v659, %v679
    %s682 = sld [smem:[#allocation9 + $0x12]]
    %s683 = sld [smem:[#allocation9 + $0x43]]
    %v684 = vstv %s682
    %v685 = vmul.f32 %v265, %v684
    %v686 = vstv %s683
    %v687 = vmul.f32 %v268, %v686
    %v688 = vadd.f32 %v685, %v687
    %v689 = vmul.f32 %v209, %v252
    %691 = vrot.lane.b32.xlu0 %v689, 113
    %v692 = vpop.permute.xlu0 %691
    %v693 = vrot.slane %v692, 7
    %vm694 = vcmask 924672
    %v695 = vsel %vm694, %v693, %v692
    %v697 = vmul.f32 %v688, %v695
    %699 = vrot.lane.b32.xlu0 %v697, 92
    %v700 = vpop.permute.xlu0 %699
    %v701 = vrot.slane %v700, 1
    %vm702 = vcmask 752640
    %v703 = vsel %vm702, %v700, %v701
    %v705 = vadd.f32 %v681, %v703
    %s706 = sld [smem:[#allocation9 + $0x13]]
    %s707 = sld [smem:[#allocation9 + $0x44]]
    %v708 = vstv %s706
    %v709 = vmul.f32 %v265, %v708
    %v710 = vstv %s707
    %v711 = vmul.f32 %v268, %v710
    %v712 = vadd.f32 %v709, %v711
    %v713 = vmul.f32 %v209, %v257
    %715 = vrot.lane.b32.xlu0 %v713, 114
    %v716 = vpop.permute.xlu0 %715
    %v717 = vrot.slane %v716, 7
    %vm718 = vcmask 932864
    %v719 = vsel %vm718, %v717, %v716
    %v721 = vmul.f32 %v712, %v719
    %723 = vrot.lane.b32.xlu0 %v721, 91
    %v724 = vpop.permute.xlu0 %723
    %v725 = vrot.slane %v724, 1
    %vm726 = vcmask 744448
    %v727 = vsel %vm726, %v724, %v725
    %v729 = vadd.f32 %v705, %v727
    %s730 = sld [smem:[#allocation9 + $0x14]]
    %s731 = sld [smem:[#allocation9 + $0x45]]
    %v732 = vstv %s730
    %v733 = vmul.f32 %v265, %v732
    %v734 = vstv %s731
    %v735 = vmul.f32 %v268, %v734
    %v736 = vadd.f32 %v733, %v735
    %v737 = vmul.f32 %v209, %v262
    %739 = vrot.lane.b32.xlu0 %v737, 115
    %v740 = vpop.permute.xlu0 %739
    %v741 = vrot.slane %v740, 7
    %vm742 = vcmask 941056
    %v743 = vsel %vm742, %v741, %v740
    %v745 = vmul.f32 %v736, %v743
    %747 = vrot.lane.b32.xlu0 %v745, 90
    %v748 = vpop.permute.xlu0 %747
    %v749 = vrot.slane %v748, 1
    %vm750 = vcmask 736256
    %v751 = vsel %vm750, %v748, %v749
    %v753 = vadd.f32 %v729, %v751
    %s754 = sld [smem:[#allocation9 + $0x15]]
    %s755 = sld [smem:[#allocation9 + $0x46]]
    %v756 = vstv %s754
    %v757 = vmul.f32 %v265, %v756
    %v758 = vstv %s755
    %v759 = vmul.f32 %v268, %v758
    %v760 = vadd.f32 %v757, %v759
    %v761 = vmul.f32 %v213, %v233
    %763 = vrot.lane.b32.xlu0 %v761, 125
    %v764 = vpop.permute.xlu0 %763
    %v765 = vrot.slane %v764, 7
    %v766 = vsel %vm350, %v765, %v764
    %v768 = vmul.f32 %v760, %v766
    %770 = vrot.lane.b32.xlu0 %v768, 80
    %v771 = vpop.permute.xlu0 %770
    %v772 = vrot.slane %v771, 1
    %v773 = vsel %vm342, %v771, %v772
    %v775 = vadd.f32 %v753, %v773
    %s776 = sld [smem:[#allocation9 + $0x16]]
    %s777 = sld [smem:[#allocation9 + $0x47]]
    %v778 = vstv %s776
    %v779 = vmul.f32 %v265, %v778
    %v780 = vstv %s777
    %v781 = vmul.f32 %v268, %v780
    %v782 = vadd.f32 %v779, %v781
    %v783 = vmul.f32 %v213, %v238
    %785 = vrot.lane.b32.xlu0 %v783, 126
    %v786 = vpop.permute.xlu0 %785
    %v787 = vrot.slane %v786, 7
    %v788 = vsel %vm326, %v787, %v786
    %v790 = vmul.f32 %v782, %v788
    %792 = vrot.lane.b32.xlu0 %v790, 79
    %v793 = vpop.permute.xlu0 %792
    %v794 = vrot.slane %v793, 1
    %v795 = vsel %vm318, %v793, %v794
    %v797 = vadd.f32 %v775, %v795
    %s798 = sld [smem:[#allocation9 + $0x17]]
    %s799 = sld [smem:[#allocation9 + $0x48]]
    %v800 = vstv %s798
    %v801 = vmul.f32 %v265, %v800
    %v802 = vstv %s799
    %v803 = vmul.f32 %v268, %v802
    %v804 = vadd.f32 %v801, %v803
    %v805 = vmul.f32 %v213, %v243
    %807 = vrot.lane.b32.xlu0 %v805, 127
    %v808 = vpop.permute.xlu0 %807
    %v809 = vrot.slane %v808, 7
    %v810 = vsel %vm302, %v809, %v808
    %v812 = vmul.f32 %v804, %v810
    %814 = vrot.lane.b32.xlu0 %v812, 78
    %v815 = vpop.permute.xlu0 %814
    %v816 = vrot.slane %v815, 1
    %v817 = vsel %vm294, %v815, %v816
    %v819 = vadd.f32 %v797, %v817
    %s820 = sld [smem:[#allocation9 + $0x18]]
    %s821 = sld [smem:[#allocation9 + $0x49]]
    %v822 = vld [vmem:[#allocation2 + $0x1] sm:$0xf]
    %v823 = vstv %s820
    %v824 = vmul.f32 %v822, %v823
    %v825 = vld [vmem:[%s190 + $0x1] sm:$0xf]
    %v826 = vstv %s821
    %v827 = vmul.f32 %v825, %v826
    %v828 = vadd.f32 %v824, %v827
    %v829 = vmul.f32 %v213, %v247
    %v830 = vmul.f32 %v828, %v829
    %832 = vrot.lane.b32.xlu0 %v830, 77
    %v833 = vpop.permute.xlu0 %832
    %v834 = vrot.slane %v833, 7
    %v835 = vsel %vm277, %v834, %v833
    %v837 = vadd.f32 %v819, %v835
    %s838 = sld [smem:[#allocation9 + $0x19]]
    %s839 = sld [smem:[#allocation9 + $0x4a]]
    %v840 = vld [vmem:[#allocation2 + $0x1] sm:$0x1f]
    %v841 = vstv %s838
    %v842 = vmul.f32 %v840, %v841
    %v843 = vld [vmem:[%s190 + $0x1] sm:$0x1f]
    %v844 = vstv %s839
    %v845 = vmul.f32 %v843, %v844
    %v846 = vadd.f32 %v842, %v845
    %v847 = vmul.f32 %v213, %v252
    %849 = vrot.lane.b32.xlu0 %v847, 1
    %v850 = vpop.permute.xlu0 %849
    %v851 = vrot.slane %v850, 7
    %vm852 = vcmask 7168
    %v853 = vsel %vm852, %v851, %v850
    %v855 = vmul.f32 %v846, %v853
    %857 = vrot.lane.b32.xlu0 %v855, 76
    %v858 = vpop.permute.xlu0 %857
    %v859 = vrot.slane %v858, 7
    %vm860 = vcmask 621568
    %v861 = vsel %vm860, %v859, %v858
    %v863 = vadd.f32 %v837, %v861
    %s864 = sld [smem:[#allocation9 + $0x1a]]
    %s865 = sld [smem:[#allocation9 + $0x4b]]
    %v866 = vstv %s864
    %v867 = vmul.f32 %v840, %v866
    %v868 = vstv %s865
    %v869 = vmul.f32 %v843, %v868
    %v870 = vadd.f32 %v867, %v869
    %v871 = vmul.f32 %v213, %v257
    %873 = vrot.lane.b32.xlu0 %v871, 2
    %v874 = vpop.permute.xlu0 %873
    %v875 = vrot.slane %v874, 7
    %vm876 = vcmask 15360
    %v877 = vsel %vm876, %v875, %v874
    %v879 = vmul.f32 %v870, %v877
    %881 = vrot.lane.b32.xlu0 %v879, 75
    %v882 = vpop.permute.xlu0 %881
    %v883 = vrot.slane %v882, 7
    %vm884 = vcmask 613376
    %v885 = vsel %vm884, %v883, %v882
    %v887 = vadd.f32 %v863, %v885
    %s888 = sld [smem:[#allocation9 + $0x1b]]
    %s889 = sld [smem:[#allocation9 + $0x4c]]
    %v890 = vstv %s888
    %v891 = vmul.f32 %v840, %v890
    %v892 = vstv %s889
    %v893 = vmul.f32 %v843, %v892
    %v894 = vadd.f32 %v891, %v893
    %v895 = vmul.f32 %v213, %v262
    %897 = vrot.lane.b32.xlu0 %v895, 3
    %v898 = vpop.permute.xlu0 %897
    %v899 = vrot.slane %v898, 7
    %vm900 = vcmask 23552
    %v901 = vsel %vm900, %v899, %v898
    %v903 = vmul.f32 %v894, %v901
    %905 = vrot.lane.b32.xlu0 %v903, 74
    %v906 = vpop.permute.xlu0 %905
    %v907 = vrot.slane %v906, 7
    %vm908 = vcmask 605184
    %v909 = vsel %vm908, %v907, %v906
    %v911 = vadd.f32 %v887, %v909
    %s912 = sld [smem:[#allocation9 + $0x1c]]
    %s913 = sld [smem:[#allocation9 + $0x4d]]
    %v914 = vstv %s912
    %v915 = vmul.f32 %v840, %v914
    %v916 = vstv %s913
    %v917 = vmul.f32 %v843, %v916
    %v918 = vadd.f32 %v915, %v917
    %v919 = vmul.f32 %v218, %v233
    %921 = vrot.lane.b32.xlu0 %v919, 13
    %v922 = vpop.permute.xlu0 %921
    %v923 = vrot.slane %v922, 7
    %vm924 = vcmask 105472
    %v925 = vsel %vm924, %v923, %v922
    %v927 = vmul.f32 %v918, %v925
    %929 = vrot.lane.b32.xlu0 %v927, 64
    %v930 = vpop.permute.xlu0 %929
    %v931 = vrot.slane %v930, 7
    %vm932 = vcmask 523264
    %v933 = vsel %vm932, %v931, %v930
    %v935 = vadd.f32 %v911, %v933
    %s936 = sld [smem:[#allocation9 + $0x1d]]
    %s937 = sld [smem:[#allocation9 + $0x4e]]
    %v938 = vstv %s936
    %v939 = vmul.f32 %v840, %v938
    %v940 = vstv %s937
    %v941 = vmul.f32 %v843, %v940
    %v942 = vadd.f32 %v939, %v941
    %v943 = vmul.f32 %v218, %v238
    %945 = vrot.lane.b32.xlu0 %v943, 14
    %v946 = vpop.permute.xlu0 %945
    %v947 = vrot.slane %v946, 7
    %vm948 = vcmask 113664
    %v949 = vsel %vm948, %v947, %v946
    %v951 = vmul.f32 %v942, %v949
    %953 = vrot.lane.b32.xlu0 %v951, 63
    %v954 = vpop.permute.xlu0 %953
    %v955 = vrot.slane %v954, 7
    %vm956 = vcmask 515072
    %v957 = vsel %vm956, %v955, %v954
    %v959 = vadd.f32 %v935, %v957
    %s960 = sld [smem:[#allocation9 + $0x1e]]
    %s961 = sld [smem:[#allocation9 + $0x4f]]
    %v962 = vstv %s960
    %v963 = vmul.f32 %v840, %v962
    %v964 = vstv %s961
    %v965 = vmul.f32 %v843, %v964
    %v966 = vadd.f32 %v963, %v965
    %v967 = vmul.f32 %v218, %v243
    %969 = vrot.lane.b32.xlu0 %v967, 15
    %v970 = vpop.permute.xlu0 %969
    %v971 = vrot.slane %v970, 7
    %vm972 = vcmask 121856
    %v973 = vsel %vm972, %v971, %v970
    %v975 = vmul.f32 %v966, %v973
    %977 = vrot.lane.b32.xlu0 %v975, 62
    %v978 = vpop.permute.xlu0 %977
    %v979 = vrot.slane %v978, 7
    %vm980 = vcmask 506880
    %v981 = vsel %vm980, %v979, %v978
    %v983 = vadd.f32 %v959, %v981
    %s984 = sld [smem:[#allocation9 + $0x1f]]
    %s985 = sld [smem:[#allocation9 + $0x50]]
    %v986 = vstv %s984
    %v987 = vmul.f32 %v840, %v986
    %v988 = vstv %s985
    %v989 = vmul.f32 %v843, %v988
    %v990 = vadd.f32 %v987, %v989
    %v991 = vmul.f32 %v218, %v247
    %993 = vrot.lane.b32.xlu0 %v991, 16
    %v994 = vpop.permute.xlu0 %993
    %v995 = vrot.slane %v994, 7
    %vm996 = vcmask 130048
    %v997 = vsel %vm996, %v995, %v994
    %v999 = vmul.f32 %v990, %v997
    %1001 = vrot.lane.b32.xlu0 %v999, 61
    %v1002 = vpop.permute.xlu0 %1001
    %v1003 = vrot.slane %v1002, 7
    %vm1004 = vcmask 498688
    %v1005 = vsel %vm1004, %v1003, %v1002
    %v1007 = vadd.f32 %v983, %v1005
    %s1008 = sld [smem:[#allocation9 + $0x20]]
    %s1009 = sld [smem:[#allocation9 + $0x51]]
    %v1010 = vstv %s1008
    %v1011 = vmul.f32 %v840, %v1010
    %v1012 = vstv %s1009
    %v1013 = vmul.f32 %v843, %v1012
    %v1014 = vadd.f32 %v1011, %v1013
    %v1015 = vmul.f32 %v218, %v252
    %1017 = vrot.lane.b32.xlu0 %v1015, 17
    %v1018 = vpop.permute.xlu0 %1017
    %v1019 = vrot.slane %v1018, 7
    %vm1020 = vcmask 138240
    %v1021 = vsel %vm1020, %v1019, %v1018
    %v1023 = vmul.f32 %v1014, %v1021
    %1025 = vrot.lane.b32.xlu0 %v1023, 60
    %v1026 = vpop.permute.xlu0 %1025
    %v1027 = vrot.slane %v1026, 7
    %vm1028 = vcmask 490496
    %v1029 = vsel %vm1028, %v1027, %v1026
    %v1031 = vadd.f32 %v1007, %v1029
    %s1032 = sld [smem:[#allocation9 + $0x21]]
    %s1033 = sld [smem:[#allocation9 + $0x52]]
    %v1034 = vstv %s1032
    %v1035 = vmul.f32 %v840, %v1034
    %v1036 = vstv %s1033
    %v1037 = vmul.f32 %v843, %v1036
    %v1038 = vadd.f32 %v1035, %v1037
    %v1039 = vmul.f32 %v218, %v257
    %1041 = vrot.lane.b32.xlu0 %v1039, 18
    %v1042 = vpop.permute.xlu0 %1041
    %v1043 = vrot.slane %v1042, 7
    %vm1044 = vcmask 146432
    %v1045 = vsel %vm1044, %v1043, %v1042
    %v1047 = vmul.f32 %v1038, %v1045
    %1049 = vrot.lane.b32.xlu0 %v1047, 59
    %v1050 = vpop.permute.xlu0 %1049
    %v1051 = vrot.slane %v1050, 7
    %vm1052 = vcmask 482304
    %v1053 = vsel %vm1052, %v1051, %v1050
    %v1055 = vadd.f32 %v1031, %v1053
    %s1056 = sld [smem:[#allocation9 + $0x22]]
    %s1057 = sld [smem:[#allocation9 + $0x53]]
    %v1058 = vstv %s1056
    %v1059 = vmul.f32 %v840, %v1058
    %v1060 = vstv %s1057
    %v1061 = vmul.f32 %v843, %v1060
    %v1062 = vadd.f32 %v1059, %v1061
    %v1063 = vmul.f32 %v218, %v262
    %1065 = vrot.lane.b32.xlu0 %v1063, 19
    %v1066 = vpop.permute.xlu0 %1065
    %v1067 = vrot.slane %v1066, 7
    %vm1068 = vcmask 154624
    %v1069 = vsel %vm1068, %v1067, %v1066
    %v1071 = vmul.f32 %v1062, %v1069
    %1073 = vrot.lane.b32.xlu0 %v1071, 58
    %v1074 = vpop.permute.xlu0 %1073
    %v1075 = vrot.slane %v1074, 7
    %vm1076 = vcmask 474112
    %v1077 = vsel %vm1076, %v1075, %v1074
    %v1079 = vadd.f32 %v1055, %v1077
    %s1080 = sld [smem:[#allocation9 + $0x23]]
    %s1081 = sld [smem:[#allocation9 + $0x54]]
    %v1082 = vstv %s1080
    %v1083 = vmul.f32 %v840, %v1082
    %v1084 = vstv %s1081
    %v1085 = vmul.f32 %v843, %v1084
    %v1086 = vadd.f32 %v1083, %v1085
    %v1087 = vmul.f32 %v223, %v233
    %1089 = vrot.lane.b32.xlu0 %v1087, 29
    %v1090 = vpop.permute.xlu0 %1089
    %v1091 = vrot.slane %v1090, 7
    %vm1092 = vcmask 236544
    %v1093 = vsel %vm1092, %v1091, %v1090
    %v1095 = vmul.f32 %v1086, %v1093
    %1097 = vrot.lane.b32.xlu0 %v1095, 48
    %v1098 = vpop.permute.xlu0 %1097
    %v1099 = vrot.slane %v1098, 7
    %vm1100 = vcmask 392192
    %v1101 = vsel %vm1100, %v1099, %v1098
    %v1103 = vadd.f32 %v1079, %v1101
    %s1104 = sld [smem:[#allocation9 + $0x24]]
    %s1105 = sld [smem:[#allocation9 + $0x55]]
    %v1106 = vstv %s1104
    %v1107 = vmul.f32 %v840, %v1106
    %v1108 = vstv %s1105
    %v1109 = vmul.f32 %v843, %v1108
    %v1110 = vadd.f32 %v1107, %v1109
    %v1111 = vmul.f32 %v223, %v238
    %1113 = vrot.lane.b32.xlu0 %v1111, 30
    %v1114 = vpop.permute.xlu0 %1113
    %v1115 = vrot.slane %v1114, 7
    %vm1116 = vcmask 244736
    %v1117 = vsel %vm1116, %v1115, %v1114
    %v1119 = vmul.f32 %v1110, %v1117
    %1121 = vrot.lane.b32.xlu0 %v1119, 47
    %v1122 = vpop.permute.xlu0 %1121
    %v1123 = vrot.slane %v1122, 7
    %vm1124 = vcmask 384000
    %v1125 = vsel %vm1124, %v1123, %v1122
    %v1127 = vadd.f32 %v1103, %v1125
    %s1128 = sld [smem:[#allocation9 + $0x25]]
    %s1129 = sld [smem:[#allocation9 + $0x56]]
    %v1130 = vstv %s1128
    %v1131 = vmul.f32 %v840, %v1130
    %v1132 = vstv %s1129
    %v1133 = vmul.f32 %v843, %v1132
    %v1134 = vadd.f32 %v1131, %v1133
    %v1135 = vmul.f32 %v223, %v243
    %1137 = vrot.lane.b32.xlu0 %v1135, 31
    %v1138 = vpop.permute.xlu0 %1137
    %v1139 = vrot.slane %v1138, 7
    %vm1140 = vcmask 252928
    %v1141 = vsel %vm1140, %v1139, %v1138
    %v1143 = vmul.f32 %v1134, %v1141
    %1145 = vrot.lane.b32.xlu0 %v1143, 46
    %v1146 = vpop.permute.xlu0 %1145
    %v1147 = vrot.slane %v1146, 7
    %vm1148 = vcmask 375808
    %v1149 = vsel %vm1148, %v1147, %v1146
    %v1151 = vadd.f32 %v1127, %v1149
    %s1152 = sld [smem:[#allocation9 + $0x26]]
    %s1153 = sld [smem:[#allocation9 + $0x57]]
    %v1154 = vstv %s1152
    %v1155 = vmul.f32 %v840, %v1154
    %v1156 = vstv %s1153
    %v1157 = vmul.f32 %v843, %v1156
    %v1158 = vadd.f32 %v1155, %v1157
    %v1159 = vmul.f32 %v223, %v247
    %1161 = vrot.lane.b32.xlu0 %v1159, 32
    %v1162 = vpop.permute.xlu0 %1161
    %v1163 = vrot.slane %v1162, 7
    %vm1164 = vcmask 261120
    %v1165 = vsel %vm1164, %v1163, %v1162
    %v1167 = vmul.f32 %v1158, %v1165
    %1169 = vrot.lane.b32.xlu0 %v1167, 45
    %v1170 = vpop.permute.xlu0 %1169
    %v1171 = vrot.slane %v1170, 7
    %vm1172 = vcmask 367616
    %v1173 = vsel %vm1172, %v1171, %v1170
    %v1175 = vadd.f32 %v1151, %v1173
    %s1176 = sld [smem:[#allocation9 + $0x27]]
    %s1177 = sld [smem:[#allocation9 + $0x58]]
    %v1178 = vstv %s1176
    %v1179 = vmul.f32 %v840, %v1178
    %v1180 = vstv %s1177
    %v1181 = vmul.f32 %v843, %v1180
    %v1182 = vadd.f32 %v1179, %v1181
    %v1183 = vmul.f32 %v223, %v252
    %1185 = vrot.lane.b32.xlu0 %v1183, 33
    %v1186 = vpop.permute.xlu0 %1185
    %v1187 = vrot.slane %v1186, 7
    %vm1188 = vcmask 269312
    %v1189 = vsel %vm1188, %v1187, %v1186
    %v1191 = vmul.f32 %v1182, %v1189
    %1193 = vrot.lane.b32.xlu0 %v1191, 44
    %v1194 = vpop.permute.xlu0 %1193
    %v1195 = vrot.slane %v1194, 7
    %vm1196 = vcmask 359424
    %v1197 = vsel %vm1196, %v1195, %v1194
    %v1199 = vadd.f32 %v1175, %v1197
    %s1200 = sld [smem:[#allocation9 + $0x28]]
    %s1201 = sld [smem:[#allocation9 + $0x59]]
    %v1202 = vstv %s1200
    %v1203 = vmul.f32 %v840, %v1202
    %v1204 = vstv %s1201
    %v1205 = vmul.f32 %v843, %v1204
    %v1206 = vadd.f32 %v1203, %v1205
    %v1207 = vmul.f32 %v223, %v257
    %1209 = vrot.lane.b32.xlu0 %v1207, 34
    %v1210 = vpop.permute.xlu0 %1209
    %v1211 = vrot.slane %v1210, 7
    %vm1212 = vcmask 277504
    %v1213 = vsel %vm1212, %v1211, %v1210
    %v1215 = vmul.f32 %v1206, %v1213
    %1217 = vrot.lane.b32.xlu0 %v1215, 43
    %v1218 = vpop.permute.xlu0 %1217
    %v1219 = vrot.slane %v1218, 7
    %vm1220 = vcmask 351232
    %v1221 = vsel %vm1220, %v1219, %v1218
    %v1223 = vadd.f32 %v1199, %v1221
    %s1224 = sld [smem:[#allocation9 + $0x29]]
    %s1225 = sld [smem:[#allocation9 + $0x5a]]
    %v1226 = vstv %s1224
    %v1227 = vmul.f32 %v840, %v1226
    %v1228 = vstv %s1225
    %v1229 = vmul.f32 %v843, %v1228
    %v1230 = vadd.f32 %v1227, %v1229
    %v1231 = vmul.f32 %v223, %v262
    %1233 = vrot.lane.b32.xlu0 %v1231, 35
    %v1234 = vpop.permute.xlu0 %1233
    %v1235 = vrot.slane %v1234, 7
    %vm1236 = vcmask 285696
    %v1237 = vsel %vm1236, %v1235, %v1234
    %v1239 = vmul.f32 %v1230, %v1237
    %1241 = vrot.lane.b32.xlu0 %v1239, 42
    %v1242 = vpop.permute.xlu0 %1241
    %v1243 = vrot.slane %v1242, 7
    %vm1244 = vcmask 343040
    %v1245 = vsel %vm1244, %v1243, %v1242
    %v1247 = vadd.f32 %v1223, %v1245
    %s1248 = sld [smem:[#allocation9 + $0x2a]]
    %s1249 = sld [smem:[#allocation9 + $0x5b]]
    %v1250 = vstv %s1248
    %v1251 = vmul.f32 %v840, %v1250
    %v1252 = vstv %s1249
    %v1253 = vmul.f32 %v843, %v1252
    %v1254 = vadd.f32 %v1251, %v1253
    %v1255 = vmul.f32 %v228, %v233
    %1257 = vrot.lane.b32.xlu0 %v1255, 45
    %v1258 = vpop.permute.xlu0 %1257
    %v1259 = vrot.slane %v1258, 7
    %v1260 = vsel %vm1172, %v1259, %v1258
    %v1262 = vmul.f32 %v1254, %v1260
    %1264 = vrot.lane.b32.xlu0 %v1262, 32
    %v1265 = vpop.permute.xlu0 %1264
    %v1266 = vrot.slane %v1265, 7
    %v1267 = vsel %vm1164, %v1266, %v1265
    %v1269 = vadd.f32 %v1247, %v1267
    %s1270 = sld [smem:[#allocation9 + $0x2b]]
    %s1271 = sld [smem:[#allocation9 + $0x5c]]
    %v1272 = vstv %s1270
    %v1273 = vmul.f32 %v840, %v1272
    %v1274 = vstv %s1271
    %v1275 = vmul.f32 %v843, %v1274
    %v1276 = vadd.f32 %v1273, %v1275
    %v1277 = vmul.f32 %v228, %v238
    %1279 = vrot.lane.b32.xlu0 %v1277, 46
    %v1280 = vpop.permute.xlu0 %1279
    %v1281 = vrot.slane %v1280, 7
    %v1282 = vsel %vm1148, %v1281, %v1280
    %v1284 = vmul.f32 %v1276, %v1282
    %1286 = vrot.lane.b32.xlu0 %v1284, 31
    %v1287 = vpop.permute.xlu0 %1286
    %v1288 = vrot.slane %v1287, 7
    %v1289 = vsel %vm1140, %v1288, %v1287
    %v1291 = vadd.f32 %v1269, %v1289
    %s1292 = sld [smem:[#allocation9 + $0x2c]]
    %s1293 = sld [smem:[#allocation9 + $0x5d]]
    %v1294 = vstv %s1292
    %v1295 = vmul.f32 %v840, %v1294
    %v1296 = vstv %s1293
    %v1297 = vmul.f32 %v843, %v1296
    %v1298 = vadd.f32 %v1295, %v1297
    %v1299 = vmul.f32 %v228, %v243
    %1301 = vrot.lane.b32.xlu0 %v1299, 47
    %v1302 = vpop.permute.xlu0 %1301
    %v1303 = vrot.slane %v1302, 7
    %v1304 = vsel %vm1124, %v1303, %v1302
    %v1306 = vmul.f32 %v1298, %v1304
    %1308 = vrot.lane.b32.xlu0 %v1306, 30
    %v1309 = vpop.permute.xlu0 %1308
    %v1310 = vrot.slane %v1309, 7
    %v1311 = vsel %vm1116, %v1310, %v1309
    %v1313 = vadd.f32 %v1291, %v1311
    %s1314 = sld [smem:[#allocation9 + $0x2d]]
    %s1315 = sld [smem:[#allocation9 + $0x5e]]
    %v1316 = vstv %s1314
    %v1317 = vmul.f32 %v840, %v1316
    %v1318 = vstv %s1315
    %v1319 = vmul.f32 %v843, %v1318
    %v1320 = vadd.f32 %v1317, %v1319
    %v1321 = vmul.f32 %v228, %v247
    %1323 = vrot.lane.b32.xlu0 %v1321, 48
    %v1324 = vpop.permute.xlu0 %1323
    %v1325 = vrot.slane %v1324, 7
    %v1326 = vsel %vm1100, %v1325, %v1324
    %v1328 = vmul.f32 %v1320, %v1326
    %1330 = vrot.lane.b32.xlu0 %v1328, 29
    %v1331 = vpop.permute.xlu0 %1330
    %v1332 = vrot.slane %v1331, 7
    %v1333 = vsel %vm1092, %v1332, %v1331
    %v1335 = vadd.f32 %v1313, %v1333
    %s1336 = sld [smem:[#allocation9 + $0x2e]]
    %s1337 = sld [smem:[#allocation9 + $0x5f]]
    %v1338 = vstv %s1336
    %v1339 = vmul.f32 %v840, %v1338
    %v1340 = vstv %s1337
    %v1341 = vmul.f32 %v843, %v1340
    %v1342 = vadd.f32 %v1339, %v1341
    %v1343 = vmul.f32 %v228, %v252
    %1345 = vrot.lane.b32.xlu0 %v1343, 49
    %v1346 = vpop.permute.xlu0 %1345
    %v1347 = vrot.slane %v1346, 7
    %vm1348 = vcmask 400384
    %v1349 = vsel %vm1348, %v1347, %v1346
    %v1351 = vmul.f32 %v1342, %v1349
    %1353 = vrot.lane.b32.xlu0 %v1351, 28
    %v1354 = vpop.permute.xlu0 %1353
    %v1355 = vrot.slane %v1354, 7
    %vm1356 = vcmask 228352
    %v1357 = vsel %vm1356, %v1355, %v1354
    %v1359 = vadd.f32 %v1335, %v1357
    %s1360 = sld [smem:[#allocation9 + $0x2f]]
    %s1361 = sld [smem:[#allocation9 + $0x60]]
    %v1362 = vstv %s1360
    %v1363 = vmul.f32 %v840, %v1362
    %v1364 = vstv %s1361
    %v1365 = vmul.f32 %v843, %v1364
    %v1366 = vadd.f32 %v1363, %v1365
    %v1367 = vmul.f32 %v228, %v257
    %1369 = vrot.lane.b32.xlu0 %v1367, 50
    %v1370 = vpop.permute.xlu0 %1369
    %v1371 = vrot.slane %v1370, 7
    %vm1372 = vcmask 408576
    %v1373 = vsel %vm1372, %v1371, %v1370
    %v1375 = vmul.f32 %v1366, %v1373
    %1377 = vrot.lane.b32.xlu0 %v1375, 27
    %v1378 = vpop.permute.xlu0 %1377
    %v1379 = vrot.slane %v1378, 7
    %vm1380 = vcmask 220160
    %v1381 = vsel %vm1380, %v1379, %v1378
    %v1383 = vadd.f32 %v1359, %v1381
    %s1384 = sld [smem:[#allocation9 + $0x30]]
    %s1385 = sld [smem:[#allocation9 + $0x61]]
    %v1386 = vstv %s1384
    %v1387 = vmul.f32 %v840, %v1386
    %v1388 = vstv %s1385
    %v1389 = vmul.f32 %v843, %v1388
    %v1390 = vadd.f32 %v1387, %v1389
    %v1391 = vmul.f32 %v228, %v262
    %1393 = vrot.lane.b32.xlu0 %v1391, 51
    %v1394 = vpop.permute.xlu0 %1393
    %v1395 = vrot.slane %v1394, 7
    %vm1396 = vcmask 416768
    %v1397 = vsel %vm1396, %v1395, %v1394
    %v1399 = vmul.f32 %v1390, %v1397
    %1401 = vrot.lane.b32.xlu0 %v1399, 26
    %v1402 = vpop.permute.xlu0 %1401
    %v1403 = vrot.slane %v1402, 7
    %vm1404 = vcmask 211968
    %v1405 = vsel %vm1404, %v1403, %v1402
    %v1407 = vadd.f32 %v1383, %v1405
    %v1408 = vxor.u32 %v1407, 2147483648
    %v1409 = vmul.f32 %v1408, 1.442695
    %v1410 = vpow.pop %v1409
    %v1411 = vadd.f32 %v1410, 1.0
    %v1412 = vrcp.pop %v1411
    %v1413 = vmul.f32 1.0, %v1412
    %v1414 = vld [vmem:[#allocation3] sm:$0xff]
    %v1415 = vld [vmem:[#allocation3 + $0x8] sm:$0xff]
    %v1417 = vlaneseq
    %v1418 = vshrl.u32 %v1417, 7
    %v1419 = vsub.s32 0, %v1418
    %v1420 = vrot.slane %v1413, %v1419
    %v1421 = vlaneseq
    %v1422 = vshrl.u32 %v1421, 7
    %v1423 = vsub.s32 1, %v1422
    %v1424 = vrot.slane %v1413, %v1423
    %v1425 = vlaneseq
    %v1426 = vshrl.u32 %v1425, 7
    %v1427 = vsub.s32 2, %v1426
    %v1428 = vrot.slane %v1413, %v1427
    %v1429 = vlaneseq
    %v1430 = vshrl.u32 %v1429, 7
    %v1431 = vsub.s32 3, %v1430
    %v1432 = vrot.slane %v1413, %v1431
    %v1433 = vlaneseq
    %v1434 = vshrl.u32 %v1433, 7
    %v1435 = vsub.s32 4, %v1434
    %v1436 = vrot.slane %v1413, %v1435
    %v1437 = vcombine.low %v1420, %v1424
    %v1438 = vcombine.low %v1428, %v1432
    %1439 = vrot.lane.b32.xlu0 %v1437, 51
    %v1440 = vpop.permute.xlu0 %1439
    %1441 = vrot.lane.b32.xlu0 %v1438, 51
    %v1442 = vpop.permute.xlu0 %1441
    %1443 = vrot.lane.b32.xlu0 %v1436, 51
    %v1444 = vpop.permute.xlu0 %1443
    %v1445 = vrot.slane %v1440, 4
    %v1446 = vrot.slane %v1442, 4
    %v1447 = vrot.slane %v1444, 4
    %v1448 = vsel %vm60, %v1445, %v1446
    %v1449 = vsel %vm1396, %v1440, %v1448
    %v1450 = vsel %vm60, %v1446, %v1447
    %v1451 = vsel %vm1396, %v1442, %v1450
    %v1454 = vmul.f32 %v1414, %v1449
    %v1455 = vmul.f32 %v1415, %v1451
    %1456 = vst [vmem:[#allocation10] sm:$0xff] %v1454
    %1457 = vst [vmem:[#allocation10 + $0x8] sm:$0xff] %v1455
    // Predicated region
    $region26: #{tpu_custom_call.1} parent=1 // pred_check
      _
    $region27: #{tpu_custom_call.1} parent=1 // pred_check_branch
      %1459 = sbr.rel (0) target = $region29
    $region28: #{tpu_custom_call.1} parent=1 // pred_region
      %s1461 = ssub.s32 256, 256
      %1462 = vsyncadd [#allocation5], %s1461
      %s1464 = sshll.u32 [#allocation10], 4
      %s1465 = int_to_ptr.vmem [resolvable:$true] %s1464
      %1467 = dma.vmem_to_hbm [thread:$0]  %s1465, 256, %s3, [#allocation5]
    $region29: #{tpu_custom_call.1} parent=1 // pred_fallthru
      _
    // Predicated region
    $region30: #{tpu_custom_call.1} parent=1 // pred_check
      _
    $region31: #{tpu_custom_call.1} parent=1 // pred_check_branch
      %1469 = sbr.rel (0) target = $region33
    $region32: #{tpu_custom_call.1} parent=1 // pred_region
      %1470 = dma.done [#allocation5], 256
    $region33: #{tpu_custom_call.1} parent=1 // pred_fallthru
      _
    %1471 = vsyncpa [#allocation4], 1
    %1472 = vsyncpa [#allocation8], 1
    %1473 = vsyncpa [#allocation5], 1
    %1474 = vsyncpa [#allocation6], 1

</llo_original>
